<compile_context>
chip_gen: v7x
topology: tpu7x:2x2x1
jax: 0.10.0
libtpu: 0.0.40
codegen_flags: <defaults>
</compile_context>

<pallas_src>
import functools
import math

import jax
import jax.numpy as jnp
from jax import lax
from jax.experimental import pallas as pl
from jax.experimental.pallas import tpu as pltpu


# ------------------------------ tiling helper ------------------------------

def _row_tile(m, target):
    """Pick a row tile size: full dim if small, else a multiple of 8 <= target."""
    if m <= target:
        return m
    for t in range(target, 0, -8):
        if m % t == 0:
            return t
    return target  # non-dividing fallback; Pallas pads the last partial tile


# ----------------------------- Pallas kernels -----------------------------

def _embed_kernel(x_ref, w_ref, b_ref, g_ref, bt_ref, pe_ref, o_ref, *, eps, xscale):
    # Linear -> LayerNorm(eps=1e-5) -> Dropout(identity) -> ReLU -> PositionalEncoding
    x = x_ref[0]                                              # (tl, Din) f32
    y = jnp.dot(x.astype(jnp.bfloat16), w_ref[...],
                preferred_element_type=jnp.float32) + b_ref[...]
    mean = jnp.mean(y, axis=-1, keepdims=True)
    var = jnp.mean(jnp.square(y - mean), axis=-1, keepdims=True)
    y = (y - mean) * lax.rsqrt(var + eps)
    y = y * g_ref[...] + bt_ref[...]
    y = jnp.maximum(y, 0.0)                                   # ReLU
    y = y * xscale + pe_ref[0]                                # x*sqrt(d_model) + pe
    o_ref[0] = y.astype(o_ref.dtype)


def pallas_embed(x, w_bf16, b, gamma, beta, pe, xscale, eps=1e-5, l_tile=256):
    B, L, Din = x.shape
    D = w_bf16.shape[1]
    tl = _row_tile(L, l_tile)
    return pl.pallas_call(
        functools.partial(_embed_kernel, eps=eps, xscale=xscale),
        out_shape=jax.ShapeDtypeStruct((B, L, D), jnp.float32),
        grid=(B, pl.cdiv(L, tl)),
        in_specs=[
            pl.BlockSpec((1, tl, Din), lambda b_, l_: (b_, l_, 0)),
            pl.BlockSpec((Din, D), lambda b_, l_: (0, 0)),
            pl.BlockSpec((1, D), lambda b_, l_: (0, 0)),
            pl.BlockSpec((1, D), lambda b_, l_: (0, 0)),
            pl.BlockSpec((1, D), lambda b_, l_: (0, 0)),
            pl.BlockSpec((1, tl, D), lambda b_, l_: (0, l_, 0)),
        ],
        out_specs=pl.BlockSpec((1, tl, D), lambda b_, l_: (b_, l_, 0)),
        compiler_params=pltpu.CompilerParams(
            dimension_semantics=("parallel", "parallel")),
    )(x, w_bf16, b.reshape(1, D), gamma.reshape(1, D), beta.reshape(1, D), pe)


def _ln_linear_kernel(x_ref, g_ref, bt_ref, w_ref, b_ref, o_ref, *, eps, relu):
    # LayerNorm prologue (f32) -> bf16 matmul (f32 accum) -> optional ReLU
    x = x_ref[...]                                            # (tm, K) f32
    mean = jnp.mean(x, axis=-1, keepdims=True)
    var = jnp.mean(jnp.square(x - mean), axis=-1, keepdims=True)
    y = (x - mean) * lax.rsqrt(var + eps)
    y = y * g_ref[...] + bt_ref[...]
    out = jnp.dot(y.astype(jnp.bfloat16), w_ref[...],
                  preferred_element_type=jnp.float32) + b_ref[...]
    if relu:
        out = jnp.maximum(out, 0.0)
    o_ref[...] = out.astype(o_ref.dtype)


def pallas_ln_linear(x, gamma, beta, w_bf16, b, eps, relu=False, m_tile=256):
    M, K = x.shape
    N = w_bf16.shape[1]
    tm = _row_tile(M, m_tile)
    return pl.pallas_call(
        functools.partial(_ln_linear_kernel, eps=eps, relu=relu),
        out_shape=jax.ShapeDtypeStruct((M, N), jnp.float32),
        grid=(pl.cdiv(M, tm),),
        in_specs=[
            pl.BlockSpec((tm, K), lambda i: (i, 0)),
            pl.BlockSpec((1, K), lambda i: (0, 0)),
            pl.BlockSpec((1, K), lambda i: (0, 0)),
            pl.BlockSpec((K, N), lambda i: (0, 0)),
            pl.BlockSpec((1, N), lambda i: (0, 0)),
        ],
        out_specs=pl.BlockSpec((tm, N), lambda i: (i, 0)),
        compiler_params=pltpu.CompilerParams(dimension_semantics=("parallel",)),
    )(x, gamma.reshape(1, K), beta.reshape(1, K), w_bf16, b.reshape(1, N))


def _linear_residual_kernel(x_ref, w_ref, b_ref, r_ref, o_ref):
    # bf16 matmul (f32 accum) + bias + residual add (all fused)
    out = jnp.dot(x_ref[...].astype(jnp.bfloat16), w_ref[...],
                  preferred_element_type=jnp.float32) + b_ref[...]
    o_ref[...] = (r_ref[...] + out).astype(o_ref.dtype)


def pallas_linear_residual(x, w_bf16, b, residual, m_tile=256):
    M, K = x.shape
    N = w_bf16.shape[1]
    tm = _row_tile(M, m_tile)
    return pl.pallas_call(
        _linear_residual_kernel,
        out_shape=jax.ShapeDtypeStruct((M, N), jnp.float32),
        grid=(pl.cdiv(M, tm),),
        in_specs=[
            pl.BlockSpec((tm, K), lambda i: (i, 0)),
            pl.BlockSpec((K, N), lambda i: (0, 0)),
            pl.BlockSpec((1, N), lambda i: (0, 0)),
            pl.BlockSpec((tm, N), lambda i: (i, 0)),
        ],
        out_specs=pl.BlockSpec((tm, N), lambda i: (i, 0)),
        compiler_params=pltpu.CompilerParams(dimension_semantics=("parallel",)),
    )(x, w_bf16, b.reshape(1, N), residual)


def _layernorm_kernel(x_ref, g_ref, b_ref, o_ref, *, eps):
    x = x_ref[...]
    mean = jnp.mean(x, axis=-1, keepdims=True)
    var = jnp.mean(jnp.square(x - mean), axis=-1, keepdims=True)
    y = (x - mean) * lax.rsqrt(var + eps)
    o_ref[...] = (y * g_ref[...] + b_ref[...]).astype(o_ref.dtype)


def pallas_layernorm(x, gamma, beta, eps, m_tile=512):
    M, D = x.shape
    tm = _row_tile(M, m_tile)
    return pl.pallas_call(
        functools.partial(_layernorm_kernel, eps=eps),
        out_shape=jax.ShapeDtypeStruct((M, D), jnp.float32),
        grid=(pl.cdiv(M, tm),),
        in_specs=[
            pl.BlockSpec((tm, D), lambda i: (i, 0)),
            pl.BlockSpec((1, D), lambda i: (0, 0)),
            pl.BlockSpec((1, D), lambda i: (0, 0)),
        ],
        out_specs=pl.BlockSpec((tm, D), lambda i: (i, 0)),
        compiler_params=pltpu.CompilerParams(dimension_semantics=("parallel",)),
    )(x, gamma.reshape(1, D), beta.reshape(1, D))


def _mha_kernel(q_ref, k_ref, v_ref, m_ref, o_ref, *, heads, scale):
    # One batch element per grid step, all heads; lane-dense (L, D) output.
    D = q_ref.shape[2]
    dk = D // heads
    q = q_ref[0]                                              # (L, D) f32
    k = k_ref[0]
    v = v_ref[0]
    m = m_ref[0]                                              # (1, L); 1.0 = valid key
    neg = jnp.finfo(jnp.float32).min
    ctxs = []
    for h in range(heads):                                    # static unroll, H small
        sl = slice(h * dk, (h + 1) * dk)
        qh = q[:, sl].astype(jnp.bfloat16)
        kh = k[:, sl].astype(jnp.bfloat16)
        vh = v[:, sl].astype(jnp.bfloat16)
        s = lax.dot_general(qh, kh, (((1,), (1,)), ((), ())),
                            preferred_element_type=jnp.float32) * scale   # (L, L)
        s = jnp.where(m > 0.0, s, neg)                        # masked_fill(min_value)
        smax = jnp.max(s, axis=-1, keepdims=True)
        e = jnp.exp(s - smax)
        inv = pl.reciprocal(jnp.sum(e, axis=-1, keepdims=True), approx=True)
        attn = e * inv
        attn = jnp.where(m > 0.0, attn, 0.0)                  # masked_fill(0.0)
        ctxs.append(jnp.dot(attn.astype(jnp.bfloat16), vh,
                            preferred_element_type=jnp.float32))          # (L, dk)
    o_ref[0] = jnp.concatenate(ctxs, axis=-1).astype(o_ref.dtype)         # (L, D)


def pallas_mha(q, k, v, mask3, heads, scale):
    B, L, D = q.shape
    return pl.pallas_call(
        functools.partial(_mha_kernel, heads=heads, scale=scale),
        out_shape=jax.ShapeDtypeStruct((B, L, D), jnp.float32),
        grid=(B,),
        in_specs=[
            pl.BlockSpec((1, L, D), lambda b: (b, 0, 0)),
            pl.BlockSpec((1, L, D), lambda b: (b, 0, 0)),
            pl.BlockSpec((1, L, D), lambda b: (b, 0, 0)),
            pl.BlockSpec((1, 1, L), lambda b: (b, 0, 0)),
        ],
        out_specs=pl.BlockSpec((1, L, D), lambda b: (b, 0, 0)),
        compiler_params=pltpu.CompilerParams(dimension_semantics=("parallel",)),
    )(q, k, v, mask3)


# --------------------------- parameter creation ----------------------------

def init_params(key, input_size, d_model, d_ff, num_blocks, max_len):
    def dense(k, fan_in, fan_out):
        kw, kb = jax.random.split(k)
        lim = 1.0 / math.sqrt(fan_in)
        w = jax.random.uniform(kw, (fan_in, fan_out), jnp.float32, -lim, lim)
        b = jax.random.uniform(kb, (fan_out,), jnp.float32, -lim, lim)
        return w, b

    keys = jax.random.split(key, 1 + num_blocks)
    params = {}
    # embed: Linear(input_size, d_model) -> LayerNorm -> Dropout -> ReLU -> PosEnc
    params["embed_w"], params["embed_b"] = dense(keys[0], input_size, d_model)
    params["embed_ln_g"] = jnp.ones((d_model,), jnp.float32)
    params["embed_ln_b"] = jnp.zeros((d_model,), jnp.float32)
    # sinusoidal positional-encoding table (1, max_len, d_model)
    pos = jnp.arange(max_len, dtype=jnp.float32)[:, None]
    div = jnp.exp(jnp.arange(0, d_model, 2, dtype=jnp.float32)
                  * -(math.log(10000.0) / d_model))
    pe = jnp.zeros((max_len, d_model), jnp.float32)
    pe = pe.at[:, 0::2].set(jnp.sin(pos * div))
    pe = pe.at[:, 1::2].set(jnp.cos(pos * div))
    params["pe"] = pe[None]

    blocks = []
    for i in range(num_blocks):
        sub = jax.random.split(keys[1 + i], 6)
        blk = {}
        blk["norm1_g"] = jnp.ones((d_model,), jnp.float32)
        blk["norm1_b"] = jnp.zeros((d_model,), jnp.float32)
        blk["wq"], blk["bq"] = dense(sub[0], d_model, d_model)
        blk["wk"], blk["bk"] = dense(sub[1], d_model, d_model)
        blk["wv"], blk["bv"] = dense(sub[2], d_model, d_model)
        blk["wo"], blk["bo"] = dense(sub[3], d_model, d_model)
        blk["norm2_g"] = jnp.ones((d_model,), jnp.float32)
        blk["norm2_b"] = jnp.zeros((d_model,), jnp.float32)
        blk["w1"], blk["b1"] = dense(sub[4], d_model, d_ff)
        blk["w2"], blk["b2"] = dense(sub[5], d_ff, d_model)
        blocks.append(blk)
    params["blocks"] = blocks
    params["after_g"] = jnp.ones((d_model,), jnp.float32)
    params["after_b"] = jnp.zeros((d_model,), jnp.float32)
    return params


def prepare_params(params):
    """Fuse Q/K/V weights and cast matmul weights to bf16 (done once, outside jit)."""
    fp = {
        "embed_w": params["embed_w"].astype(jnp.bfloat16),
        "embed_b": params["embed_b"],
        "embed_ln_g": params["embed_ln_g"],
        "embed_ln_b": params["embed_ln_b"],
        "pe": params["pe"],
        "after_g": params["after_g"],
        "after_b": params["after_b"],
    }
    blocks = []
    for blk in params["blocks"]:
        nb = {
            "norm1_g": blk["norm1_g"], "norm1_b": blk["norm1_b"],
            "wqkv": jnp.concatenate([blk["wq"], blk["wk"], blk["wv"]],
                                    axis=1).astype(jnp.bfloat16),
            "bqkv": jnp.concatenate([blk["bq"], blk["bk"], blk["bv"]]),
            "wo": blk["wo"].astype(jnp.bfloat16), "bo": blk["bo"],
            "norm2_g": blk["norm2_g"], "norm2_b": blk["norm2_b"],
            "w1": blk["w1"].astype(jnp.bfloat16), "b1": blk["b1"],
            "w2": blk["w2"].astype(jnp.bfloat16), "b2": blk["b2"],
        }
        blocks.append(nb)
    fp["blocks"] = blocks
    return fp


# ------------------------------ forward pass -------------------------------

def transformer_encoder_forward(params, xs_pad, ilens, heads):
    B, L, Din = xs_pad.shape
    D = params["embed_w"].shape[1]
    dk = D // heads

    # masks = ~make_pad_mask(ilens)[:, None, :]  -> True at valid positions
    valid = jnp.arange(L)[None, :] < ilens[:, None]            # (B, L) bool
    mask3 = valid.astype(jnp.float32)[:, None, :]               # (B, 1, L)

    # ----- embed: Linear -> LayerNorm(1e-5) -> Dropout -> ReLU -> PosEnc (fused) -----
    x = pallas_embed(xs_pad, params["embed_w"], params["embed_b"],
                     params["embed_ln_g"], params["embed_ln_b"],
                     params["pe"][:, :L], xscale=math.sqrt(D), eps=1e-5)
    x2 = x.reshape(B * L, D)

    # ----- encoder blocks (normalize_before=True, concat_after=False) -----
    for blk in params["blocks"]:
        # self-attention sub-layer: x = x + Wo( MHA( LN(x) ) )
        qkv = pallas_ln_linear(x2, blk["norm1_g"], blk["norm1_b"],
                               blk["wqkv"], blk["bqkv"], eps=1e-12)
        q = qkv[:, :D].reshape(B, L, D)
        k = qkv[:, D:2 * D].reshape(B, L, D)
        v = qkv[:, 2 * D:].reshape(B, L, D)
        ctx = pallas_mha(q, k, v, mask3, heads, scale=1.0 / math.sqrt(dk))
        x2 = pallas_linear_residual(ctx.reshape(B * L, D),
                                    blk["wo"], blk["bo"], x2)

        # position-wise feed-forward sub-layer: x = x + W2( ReLU( W1( LN(x) ) ) )
        h1 = pallas_ln_linear(x2, blk["norm2_g"], blk["norm2_b"],
                              blk["w1"], blk["b1"], eps=1e-12, relu=True)
        x2 = pallas_linear_residual(h1, blk["w2"], blk["b2"], x2)

    # ----- after_norm (normalize_before=True) -----
    x2 = pallas_layernorm(x2, params["after_g"], params["after_b"], eps=1e-12)
    x = x2.reshape(B, L, D)

    olens = valid.astype(jnp.int32).sum(axis=1)   # masks.squeeze(1).sum(1)
    return x, olens, None


# ---------------------------------- main ------------------------------------

if __name__ == "__main__":
    B, L, INPUT_SIZE = 2, 8, 16
    D_MODEL, HEADS, D_FF, NUM_BLOCKS = 32, 4, 64, 2

    key = jax.random.PRNGKey(0)
    kp, kx = jax.random.split(key)
    params = prepare_params(
        init_params(kp, INPUT_SIZE, D_MODEL, D_FF, NUM_BLOCKS, max_len=L))

    xs_pad = jax.random.normal(kx, (B, L, INPUT_SIZE), dtype=jnp.float32)
    ilens = jnp.array([8, 6], dtype=jnp.int32)

    fwd = jax.jit(transformer_encoder_forward, static_argnums=(3,))
    xs_out, olens, _ = fwd(params, xs_pad, ilens, HEADS)
    jax.block_until_ready(xs_out)
    jax.block_until_ready(olens)

    assert xs_out.shape == (B, L, D_MODEL)
    assert olens.shape == (B,)
    assert bool(jnp.all(jnp.isfinite(xs_out)))
    print("KERNEL_OK")
</pallas_src>

<mosaic_0001>
module attributes {stable_mosaic.version = 11 : i64} {
  func.func @_ln_linear_kernel(%arg0: i32, %arg1: memref<16x32xf32, #tpu.memory_space<vmem>>, %arg2: memref<1x32xf32, #tpu.memory_space<vmem>>, %arg3: memref<1x32xf32, #tpu.memory_space<vmem>>, %arg4: memref<32x96xbf16, #tpu.memory_space<vmem>>, %arg5: memref<1x96xf32, #tpu.memory_space<vmem>>, %arg6: memref<16x96xf32, #tpu.memory_space<vmem>>) attributes {dimension_semantics = [#tpu.dimension_semantics<parallel>], iteration_bounds = array<i64: 1>, scalar_prefetch = 0 : i64, scratch_operands = 0 : i64, tpu.core_type = #tpu.core_type<tc>, window_params = [{transform_indices = @transform_0, window_bounds = array<i64: 16, 32>}, {pipeline_mode = #tpu.pipeline_mode<synchronous>, transform_indices = @transform_1, window_bounds = array<i64: 1, 32>}, {pipeline_mode = #tpu.pipeline_mode<synchronous>, transform_indices = @transform_2, window_bounds = array<i64: 1, 32>}, {pipeline_mode = #tpu.pipeline_mode<synchronous>, transform_indices = @transform_3, window_bounds = array<i64: 32, 96>}, {pipeline_mode = #tpu.pipeline_mode<synchronous>, transform_indices = @transform_4, window_bounds = array<i64: 1, 96>}, {transform_indices = @transform_5, window_bounds = array<i64: 16, 96>}]} {
    %c0 = arith.constant 0 : index
    %c0_0 = arith.constant 0 : index
    %0 = vector.load %arg1[%c0, %c0_0] : memref<16x32xf32, #tpu.memory_space<vmem>>, vector<16x32xf32>
    %cst = arith.constant dense<0.000000e+00> : vector<16xf32>
    %1 = vector.multi_reduction <add>, %0, %cst [1] : vector<16x32xf32> to vector<16xf32>
    %2 = vector.shape_cast %1 : vector<16xf32> to vector<16x1xf32>
    %cst_1 = arith.constant 3.200000e+01 : f32
    %3 = vector.broadcast %cst_1 : f32 to vector<16x1xf32>
    %4 = arith.divf %2, %3 : vector<16x1xf32>
    %5 = vector.broadcast %4 : vector<16x1xf32> to vector<16x32xf32>
    %6 = arith.subf %0, %5 : vector<16x32xf32>
    %7 = arith.mulf %6, %6 : vector<16x32xf32>
    %cst_2 = arith.constant dense<0.000000e+00> : vector<16xf32>
    %8 = vector.multi_reduction <add>, %7, %cst_2 [1] : vector<16x32xf32> to vector<16xf32>
    %9 = vector.shape_cast %8 : vector<16xf32> to vector<16x1xf32>
    %cst_3 = arith.constant 3.200000e+01 : f32
    %10 = vector.broadcast %cst_3 : f32 to vector<16x1xf32>
    %11 = arith.divf %9, %10 : vector<16x1xf32>
    %12 = vector.broadcast %4 : vector<16x1xf32> to vector<16x32xf32>
    %13 = arith.subf %0, %12 : vector<16x32xf32>
    %cst_4 = arith.constant 9.99999996E-13 : f32
    %14 = vector.broadcast %cst_4 : f32 to vector<16x1xf32>
    %15 = arith.addf %11, %14 : vector<16x1xf32>
    %16 = math.rsqrt %15 : vector<16x1xf32>
    %17 = vector.broadcast %16 : vector<16x1xf32> to vector<16x32xf32>
    %18 = arith.mulf %13, %17 : vector<16x32xf32>
    %c0_5 = arith.constant 0 : index
    %c0_6 = arith.constant 0 : index
    %19 = vector.load %arg2[%c0_5, %c0_6] : memref<1x32xf32, #tpu.memory_space<vmem>>, vector<1x32xf32>
    %20 = vector.broadcast %19 : vector<1x32xf32> to vector<16x32xf32>
    %21 = arith.mulf %18, %20 : vector<16x32xf32>
    %c0_7 = arith.constant 0 : index
    %c0_8 = arith.constant 0 : index
    %22 = vector.load %arg3[%c0_7, %c0_8] : memref<1x32xf32, #tpu.memory_space<vmem>>, vector<1x32xf32>
    %23 = vector.broadcast %22 : vector<1x32xf32> to vector<16x32xf32>
    %24 = arith.addf %21, %23 : vector<16x32xf32>
    %25 = arith.truncf %24 : vector<16x32xf32> to vector<16x32xbf16>
    %c0_9 = arith.constant 0 : index
    %c0_10 = arith.constant 0 : index
    %26 = vector.load %arg4[%c0_9, %c0_10] : memref<32x96xbf16, #tpu.memory_space<vmem>>, vector<32x96xbf16>
    %cst_11 = arith.constant dense<0.000000e+00> : vector<16x96xf32>
    %27 = tpu.matmul %25, %26, %cst_11 {dimension_numbers = #tpu.dot_dimension_numbers<[1], [0], [0], [1], [0, 0, 1, 1], [], []>} : vector<16x32xbf16>, vector<32x96xbf16>, vector<16x96xf32> -> vector<16x96xf32>
    %c0_12 = arith.constant 0 : index
    %c0_13 = arith.constant 0 : index
    %28 = vector.load %arg5[%c0_12, %c0_13] : memref<1x96xf32, #tpu.memory_space<vmem>>, vector<1x96xf32>
    %29 = vector.broadcast %28 : vector<1x96xf32> to vector<16x96xf32>
    %30 = arith.addf %27, %29 : vector<16x96xf32>
    %c0_14 = arith.constant 0 : index
    %c0_15 = arith.constant 0 : index
    %31 = vector.load %arg6[%c0_14, %c0_15] : memref<16x96xf32, #tpu.memory_space<vmem>>, vector<16x96xf32>
    tpu.vector_store %arg6[%c0_14, %c0_15], %30 {strides = array<i32>} : memref<16x96xf32, #tpu.memory_space<vmem>>, vector<16x96xf32>,
    return
  }
  func.func @transform_0(%arg0: i32) -> (i32, i32) {
    %c0_i32 = arith.constant 0 : i32
    %c0_i32_0 = arith.constant 0 : i32
    return %arg0, %c0_i32 : i32, i32
  }
  func.func @transform_1(%arg0: i32) -> (i32, i32) {
    %c0_i32 = arith.constant 0 : i32
    %c0_i32_0 = arith.constant 0 : i32
    %c0_i32_1 = arith.constant 0 : i32
    return %c0_i32, %c0_i32_0 : i32, i32
  }
  func.func @transform_2(%arg0: i32) -> (i32, i32) {
    %c0_i32 = arith.constant 0 : i32
    %c0_i32_0 = arith.constant 0 : i32
    %c0_i32_1 = arith.constant 0 : i32
    return %c0_i32, %c0_i32_0 : i32, i32
  }
  func.func @transform_3(%arg0: i32) -> (i32, i32) {
    %c0_i32 = arith.constant 0 : i32
    %c0_i32_0 = arith.constant 0 : i32
    %c0_i32_1 = arith.constant 0 : i32
    return %c0_i32, %c0_i32_0 : i32, i32
  }
  func.func @transform_4(%arg0: i32) -> (i32, i32) {
    %c0_i32 = arith.constant 0 : i32
    %c0_i32_0 = arith.constant 0 : i32
    %c0_i32_1 = arith.constant 0 : i32
    return %c0_i32, %c0_i32_0 : i32, i32
  }
  func.func @transform_5(%arg0: i32) -> (i32, i32) {
    %c0_i32 = arith.constant 0 : i32
    %c0_i32_0 = arith.constant 0 : i32
    return %arg0, %c0_i32 : i32, i32
  }
}

module attributes {stable_mosaic.version = 11 : i64} {
  func.func @_embed_kernel(%arg0: i32, %arg1: i32, %arg2: memref<1x8x16xf32, #tpu.memory_space<vmem>>, %arg3: memref<16x32xbf16, #tpu.memory_space<vmem>>, %arg4: memref<1x32xf32, #tpu.memory_space<vmem>>, %arg5: memref<1x32xf32, #tpu.memory_space<vmem>>, %arg6: memref<1x32xf32, #tpu.memory_space<vmem>>, %arg7: memref<1x8x32xf32, #tpu.memory_space<vmem>>, %arg8: memref<1x8x32xf32, #tpu.memory_space<vmem>>) attributes {dimension_semantics = [#tpu.dimension_semantics<parallel>, #tpu.dimension_semantics<parallel>], iteration_bounds = array<i64: 2, 1>, scalar_prefetch = 0 : i64, scratch_operands = 0 : i64, tpu.core_type = #tpu.core_type<tc>, window_params = [{transform_indices = @transform_0, window_bounds = array<i64: 1, 8, 16>}, {pipeline_mode = #tpu.pipeline_mode<synchronous>, transform_indices = @transform_1, window_bounds = array<i64: 16, 32>}, {pipeline_mode = #tpu.pipeline_mode<synchronous>, transform_indices = @transform_2, window_bounds = array<i64: 1, 32>}, {pipeline_mode = #tpu.pipeline_mode<synchronous>, transform_indices = @transform_3, window_bounds = array<i64: 1, 32>}, {pipeline_mode = #tpu.pipeline_mode<synchronous>, transform_indices = @transform_4, window_bounds = array<i64: 1, 32>}, {transform_indices = @transform_5, window_bounds = array<i64: 1, 8, 32>}, {transform_indices = @transform_6, window_bounds = array<i64: 1, 8, 32>}]} {
    %c0 = arith.constant 0 : index
    %c0_0 = arith.constant 0 : index
    %c0_1 = arith.constant 0 : index
    %0 = vector.load %arg2[%c0, %c0_0, %c0_1] : memref<1x8x16xf32, #tpu.memory_space<vmem>>, vector<1x8x16xf32>
    %1 = vector.shape_cast %0 : vector<1x8x16xf32> to vector<8x16xf32>
    %2 = arith.truncf %1 : vector<8x16xf32> to vector<8x16xbf16>
    %c0_2 = arith.constant 0 : index
    %c0_3 = arith.constant 0 : index
    %3 = vector.load %arg3[%c0_2, %c0_3] : memref<16x32xbf16, #tpu.memory_space<vmem>>, vector<16x32xbf16>
    %cst = arith.constant dense<0.000000e+00> : vector<8x32xf32>
    %4 = tpu.matmul %2, %3, %cst {dimension_numbers = #tpu.dot_dimension_numbers<[1], [0], [0], [1], [0, 0, 1, 1], [], []>} : vector<8x16xbf16>, vector<16x32xbf16>, vector<8x32xf32> -> vector<8x32xf32>
    %c0_4 = arith.constant 0 : index
    %c0_5 = arith.constant 0 : index
    %5 = vector.load %arg4[%c0_4, %c0_5] : memref<1x32xf32, #tpu.memory_space<vmem>>, vector<1x32xf32>
    %6 = vector.broadcast %5 : vector<1x32xf32> to vector<8x32xf32>
    %7 = arith.addf %4, %6 : vector<8x32xf32>
    %cst_6 = arith.constant dense<0.000000e+00> : vector<8xf32>
    %8 = vector.multi_reduction <add>, %7, %cst_6 [1] : vector<8x32xf32> to vector<8xf32>
    %9 = vector.shape_cast %8 : vector<8xf32> to vector<8x1xf32>
    %cst_7 = arith.constant 3.200000e+01 : f32
    %10 = vector.broadcast %cst_7 : f32 to vector<8x1xf32>
    %11 = arith.divf %9, %10 : vector<8x1xf32>
    %12 = vector.broadcast %11 : vector<8x1xf32> to vector<8x32xf32>
    %13 = arith.subf %7, %12 : vector<8x32xf32>
    %14 = arith.mulf %13, %13 : vector<8x32xf32>
    %cst_8 = arith.constant dense<0.000000e+00> : vector<8xf32>
    %15 = vector.multi_reduction <add>, %14, %cst_8 [1] : vector<8x32xf32> to vector<8xf32>
    %16 = vector.shape_cast %15 : vector<8xf32> to vector<8x1xf32>
    %cst_9 = arith.constant 3.200000e+01 : f32
    %17 = vector.broadcast %cst_9 : f32 to vector<8x1xf32>
    %18 = arith.divf %16, %17 : vector<8x1xf32>
    %19 = vector.broadcast %11 : vector<8x1xf32> to vector<8x32xf32>
    %20 = arith.subf %7, %19 : vector<8x32xf32>
    %cst_10 = arith.constant 9.99999974E-6 : f32
    %21 = vector.broadcast %cst_10 : f32 to vector<8x1xf32>
    %22 = arith.addf %18, %21 : vector<8x1xf32>
    %23 = math.rsqrt %22 : vector<8x1xf32>
    %24 = vector.broadcast %23 : vector<8x1xf32> to vector<8x32xf32>
    %25 = arith.mulf %20, %24 : vector<8x32xf32>
    %c0_11 = arith.constant 0 : index
    %c0_12 = arith.constant 0 : index
    %26 = vector.load %arg5[%c0_11, %c0_12] : memref<1x32xf32, #tpu.memory_space<vmem>>, vector<1x32xf32>
    %27 = vector.broadcast %26 : vector<1x32xf32> to vector<8x32xf32>
    %28 = arith.mulf %25, %27 : vector<8x32xf32>
    %c0_13 = arith.constant 0 : index
    %c0_14 = arith.constant 0 : index
    %29 = vector.load %arg6[%c0_13, %c0_14] : memref<1x32xf32, #tpu.memory_space<vmem>>, vector<1x32xf32>
    %30 = vector.broadcast %29 : vector<1x32xf32> to vector<8x32xf32>
    %31 = arith.addf %28, %30 : vector<8x32xf32>
    %cst_15 = arith.constant 0.000000e+00 : f32
    %32 = vector.broadcast %cst_15 : f32 to vector<8x32xf32>
    %33 = arith.maximumf %31, %32 : vector<8x32xf32>
    %cst_16 = arith.constant 5.65685415 : f32
    %34 = vector.broadcast %cst_16 : f32 to vector<8x32xf32>
    %35 = arith.mulf %33, %34 : vector<8x32xf32>
    %c0_17 = arith.constant 0 : index
    %c0_18 = arith.constant 0 : index
    %c0_19 = arith.constant 0 : index
    %36 = vector.load %arg7[%c0_17, %c0_18, %c0_19] : memref<1x8x32xf32, #tpu.memory_space<vmem>>, vector<1x8x32xf32>
    %37 = vector.shape_cast %36 : vector<1x8x32xf32> to vector<8x32xf32>
    %38 = arith.addf %35, %37 : vector<8x32xf32>
    %c0_20 = arith.constant 0 : index
    %c0_21 = arith.constant 0 : index
    %c0_22 = arith.constant 0 : index
    %39 = vector.load %arg8[%c0_20, %c0_21, %c0_22] : memref<1x8x32xf32, #tpu.memory_space<vmem>>, vector<1x8x32xf32>
    %40 = vector.shape_cast %39 : vector<1x8x32xf32> to vector<8x32xf32>
    %41 = vector.shape_cast %38 : vector<8x32xf32> to vector<1x8x32xf32>
    tpu.vector_store %arg8[%c0_20, %c0_21, %c0_22], %41 {strides = array<i32>} : memref<1x8x32xf32, #tpu.memory_space<vmem>>, vector<1x8x32xf32>,
    return
  }
  func.func @transform_0(%arg0: i32, %arg1: i32) -> (i32, i32, i32) {
    %c0_i32 = arith.constant 0 : i32
    %c0_i32_0 = arith.constant 0 : i32
    return %arg0, %arg1, %c0_i32 : i32, i32, i32
  }
  func.func @transform_1(%arg0: i32, %arg1: i32) -> (i32, i32) {
    %c0_i32 = arith.constant 0 : i32
    %c0_i32_0 = arith.constant 0 : i32
    %c0_i32_1 = arith.constant 0 : i32
    return %c0_i32, %c0_i32_0 : i32, i32
  }
  func.func @transform_2(%arg0: i32, %arg1: i32) -> (i32, i32) {
    %c0_i32 = arith.constant 0 : i32
    %c0_i32_0 = arith.constant 0 : i32
    %c0_i32_1 = arith.constant 0 : i32
    return %c0_i32, %c0_i32_0 : i32, i32
  }
  func.func @transform_3(%arg0: i32, %arg1: i32) -> (i32, i32) {
    %c0_i32 = arith.constant 0 : i32
    %c0_i32_0 = arith.constant 0 : i32
    %c0_i32_1 = arith.constant 0 : i32
    return %c0_i32, %c0_i32_0 : i32, i32
  }
  func.func @transform_4(%arg0: i32, %arg1: i32) -> (i32, i32) {
    %c0_i32 = arith.constant 0 : i32
    %c0_i32_0 = arith.constant 0 : i32
    %c0_i32_1 = arith.constant 0 : i32
    return %c0_i32, %c0_i32_0 : i32, i32
  }
  func.func @transform_5(%arg0: i32, %arg1: i32) -> (i32, i32, i32) {
    %c0_i32 = arith.constant 0 : i32
    %c0_i32_0 = arith.constant 0 : i32
    %c0_i32_1 = arith.constant 0 : i32
    return %c0_i32, %arg1, %c0_i32_0 : i32, i32, i32
  }
  func.func @transform_6(%arg0: i32, %arg1: i32) -> (i32, i32, i32) {
    %c0_i32 = arith.constant 0 : i32
    %c0_i32_0 = arith.constant 0 : i32
    return %arg0, %arg1, %c0_i32 : i32, i32, i32
  }
}

module attributes {stable_mosaic.version = 11 : i64} {
  func.func @_mha_kernel(%arg0: i32, %arg1: memref<1x8x32xf32, #tpu.memory_space<vmem>>, %arg2: memref<1x8x32xf32, #tpu.memory_space<vmem>>, %arg3: memref<1x8x32xf32, #tpu.memory_space<vmem>>, %arg4: memref<1x1x8xf32, #tpu.memory_space<vmem>>, %arg5: memref<1x8x32xf32, #tpu.memory_space<vmem>>) attributes {dimension_semantics = [#tpu.dimension_semantics<parallel>], iteration_bounds = array<i64: 2>, scalar_prefetch = 0 : i64, scratch_operands = 0 : i64, tpu.core_type = #tpu.core_type<tc>, window_params = [{transform_indices = @transform_0, window_bounds = array<i64: 1, 8, 32>}, {transform_indices = @transform_1, window_bounds = array<i64: 1, 8, 32>}, {transform_indices = @transform_2, window_bounds = array<i64: 1, 8, 32>}, {transform_indices = @transform_3, window_bounds = array<i64: 1, 1, 8>}, {transform_indices = @transform_4, window_bounds = array<i64: 1, 8, 32>}]} {
    %c0 = arith.constant 0 : index
    %c0_0 = arith.constant 0 : index
    %c0_1 = arith.constant 0 : index
    %0 = vector.load %arg1[%c0, %c0_0, %c0_1] : memref<1x8x32xf32, #tpu.memory_space<vmem>>, vector<1x8x32xf32>
    %1 = vector.shape_cast %0 : vector<1x8x32xf32> to vector<8x32xf32>
    %c0_2 = arith.constant 0 : index
    %c0_3 = arith.constant 0 : index
    %c0_4 = arith.constant 0 : index
    %2 = vector.load %arg2[%c0_2, %c0_3, %c0_4] : memref<1x8x32xf32, #tpu.memory_space<vmem>>, vector<1x8x32xf32>
    %3 = vector.shape_cast %2 : vector<1x8x32xf32> to vector<8x32xf32>
    %c0_5 = arith.constant 0 : index
    %c0_6 = arith.constant 0 : index
    %c0_7 = arith.constant 0 : index
    %4 = vector.load %arg3[%c0_5, %c0_6, %c0_7] : memref<1x8x32xf32, #tpu.memory_space<vmem>>, vector<1x8x32xf32>
    %5 = vector.shape_cast %4 : vector<1x8x32xf32> to vector<8x32xf32>
    %c0_8 = arith.constant 0 : index
    %c0_9 = arith.constant 0 : index
    %c0_10 = arith.constant 0 : index
    %6 = vector.load %arg4[%c0_8, %c0_9, %c0_10] : memref<1x1x8xf32, #tpu.memory_space<vmem>>, vector<1x1x8xf32>
    %7 = vector.shape_cast %6 : vector<1x1x8xf32> to vector<1x8xf32>
    %8 = vector.extract_strided_slice %1 {offsets = [0, 0], sizes = [8, 8], strides = [1, 1]} : vector<8x32xf32> to vector<8x8xf32>
    %9 = arith.truncf %8 : vector<8x8xf32> to vector<8x8xbf16>
    %10 = vector.extract_strided_slice %3 {offsets = [0, 0], sizes = [8, 8], strides = [1, 1]} : vector<8x32xf32> to vector<8x8xf32>
    %11 = arith.truncf %10 : vector<8x8xf32> to vector<8x8xbf16>
    %12 = vector.extract_strided_slice %5 {offsets = [0, 0], sizes = [8, 8], strides = [1, 1]} : vector<8x32xf32> to vector<8x8xf32>
    %13 = arith.truncf %12 : vector<8x8xf32> to vector<8x8xbf16>
    %cst = arith.constant dense<0.000000e+00> : vector<8x8xf32>
    %14 = tpu.matmul %9, %11, %cst {dimension_numbers = #tpu.dot_dimension_numbers<[1], [1], [0], [0], [0, 0, 1, 0], [], []>} : vector<8x8xbf16>, vector<8x8xbf16>, vector<8x8xf32> -> vector<8x8xf32>
    %cst_11 = arith.constant 0.353553385 : f32
    %15 = vector.broadcast %cst_11 : f32 to vector<8x8xf32>
    %16 = arith.mulf %14, %15 : vector<8x8xf32>
    %cst_12 = arith.constant 0.000000e+00 : f32
    %17 = vector.broadcast %cst_12 : f32 to vector<1x8xf32>
    %18 = arith.cmpf ogt, %7, %17 : vector<1x8xf32>
    %cst_13 = arith.constant -3.40282347E+38 : f32
    %19 = vector.shape_cast %18 : vector<1x8xi1> to vector<1x8xi1>
    %20 = vector.broadcast %19 : vector<1x8xi1> to vector<8x8xi1>
    %21 = vector.broadcast %cst_13 : f32 to vector<8x8xf32>
    %22 = arith.select %20, %16, %21 : vector<8x8xi1>, vector<8x8xf32>
    %cst_14 = arith.constant dense<0xFF800000> : vector<8xf32>
    %23 = vector.multi_reduction <maximumf>, %22, %cst_14 [1] : vector<8x8xf32> to vector<8xf32>
    %24 = vector.shape_cast %23 : vector<8xf32> to vector<8x1xf32>
    %25 = vector.broadcast %24 : vector<8x1xf32> to vector<8x8xf32>
    %26 = arith.subf %22, %25 : vector<8x8xf32>
    %27 = math.exp %26 : vector<8x8xf32>
    %cst_15 = arith.constant dense<0.000000e+00> : vector<8xf32>
    %28 = vector.multi_reduction <add>, %27, %cst_15 [1] : vector<8x8xf32> to vector<8xf32>
    %29 = vector.shape_cast %28 : vector<8xf32> to vector<8x1xf32>
    %30 = tpu.reciprocal %29 {approx = true} : vector<8x1xf32> -> vector<8x1xf32>
    %31 = vector.broadcast %30 : vector<8x1xf32> to vector<8x8xf32>
    %32 = arith.mulf %27, %31 : vector<8x8xf32>
    %cst_16 = arith.constant 0.000000e+00 : f32
    %33 = vector.broadcast %cst_16 : f32 to vector<1x8xf32>
    %34 = arith.cmpf ogt, %7, %33 : vector<1x8xf32>
    %cst_17 = arith.constant 0.000000e+00 : f32
    %35 = vector.shape_cast %34 : vector<1x8xi1> to vector<1x8xi1>
    %36 = vector.broadcast %35 : vector<1x8xi1> to vector<8x8xi1>
    %37 = vector.broadcast %cst_17 : f32 to vector<8x8xf32>
    %38 = arith.select %36, %32, %37 : vector<8x8xi1>, vector<8x8xf32>
    %39 = arith.truncf %38 : vector<8x8xf32> to vector<8x8xbf16>
    %cst_18 = arith.constant dense<0.000000e+00> : vector<8x8xf32>
    %40 = tpu.matmul %39, %13, %cst_18 {dimension_numbers = #tpu.dot_dimension_numbers<[1], [0], [0], [1], [0, 0, 1, 1], [], []>} : vector<8x8xbf16>, vector<8x8xbf16>, vector<8x8xf32> -> vector<8x8xf32>
    %41 = vector.extract_strided_slice %1 {offsets = [0, 8], sizes = [8, 8], strides = [1, 1]} : vector<8x32xf32> to vector<8x8xf32>
    %42 = arith.truncf %41 : vector<8x8xf32> to vector<8x8xbf16>
    %43 = vector.extract_strided_slice %3 {offsets = [0, 8], sizes = [8, 8], strides = [1, 1]} : vector<8x32xf32> to vector<8x8xf32>
    %44 = arith.truncf %43 : vector<8x8xf32> to vector<8x8xbf16>
    %45 = vector.extract_strided_slice %5 {offsets = [0, 8], sizes = [8, 8], strides = [1, 1]} : vector<8x32xf32> to vector<8x8xf32>
    %46 = arith.truncf %45 : vector<8x8xf32> to vector<8x8xbf16>
    %cst_19 = arith.constant dense<0.000000e+00> : vector<8x8xf32>
    %47 = tpu.matmul %42, %44, %cst_19 {dimension_numbers = #tpu.dot_dimension_numbers<[1], [1], [0], [0], [0, 0, 1, 0], [], []>} : vector<8x8xbf16>, vector<8x8xbf16>, vector<8x8xf32> -> vector<8x8xf32>
    %cst_20 = arith.constant 0.353553385 : f32
    %48 = vector.broadcast %cst_20 : f32 to vector<8x8xf32>
    %49 = arith.mulf %47, %48 : vector<8x8xf32>
    %cst_21 = arith.constant 0.000000e+00 : f32
    %50 = vector.broadcast %cst_21 : f32 to vector<1x8xf32>
    %51 = arith.cmpf ogt, %7, %50 : vector<1x8xf32>
    %cst_22 = arith.constant -3.40282347E+38 : f32
    %52 = vector.shape_cast %51 : vector<1x8xi1> to vector<1x8xi1>
    %53 = vector.broadcast %52 : vector<1x8xi1> to vector<8x8xi1>
    %54 = vector.broadcast %cst_22 : f32 to vector<8x8xf32>
    %55 = arith.select %53, %49, %54 : vector<8x8xi1>, vector<8x8xf32>
    %cst_23 = arith.constant dense<0xFF800000> : vector<8xf32>
    %56 = vector.multi_reduction <maximumf>, %55, %cst_23 [1] : vector<8x8xf32> to vector<8xf32>
    %57 = vector.shape_cast %56 : vector<8xf32> to vector<8x1xf32>
    %58 = vector.broadcast %57 : vector<8x1xf32> to vector<8x8xf32>
    %59 = arith.subf %55, %58 : vector<8x8xf32>
    %60 = math.exp %59 : vector<8x8xf32>
    %cst_24 = arith.constant dense<0.000000e+00> : vector<8xf32>
    %61 = vector.multi_reduction <add>, %60, %cst_24 [1] : vector<8x8xf32> to vector<8xf32>
    %62 = vector.shape_cast %61 : vector<8xf32> to vector<8x1xf32>
    %63 = tpu.reciprocal %62 {approx = true} : vector<8x1xf32> -> vector<8x1xf32>
    %64 = vector.broadcast %63 : vector<8x1xf32> to vector<8x8xf32>
    %65 = arith.mulf %60, %64 : vector<8x8xf32>
    %cst_25 = arith.constant 0.000000e+00 : f32
    %66 = vector.broadcast %cst_25 : f32 to vector<1x8xf32>
    %67 = arith.cmpf ogt, %7, %66 : vector<1x8xf32>
    %cst_26 = arith.constant 0.000000e+00 : f32
    %68 = vector.shape_cast %67 : vector<1x8xi1> to vector<1x8xi1>
    %69 = vector.broadcast %68 : vector<1x8xi1> to vector<8x8xi1>
    %70 = vector.broadcast %cst_26 : f32 to vector<8x8xf32>
    %71 = arith.select %69, %65, %70 : vector<8x8xi1>, vector<8x8xf32>
    %72 = arith.truncf %71 : vector<8x8xf32> to vector<8x8xbf16>
    %cst_27 = arith.constant dense<0.000000e+00> : vector<8x8xf32>
    %73 = tpu.matmul %72, %46, %cst_27 {dimension_numbers = #tpu.dot_dimension_numbers<[1], [0], [0], [1], [0, 0, 1, 1], [], []>} : vector<8x8xbf16>, vector<8x8xbf16>, vector<8x8xf32> -> vector<8x8xf32>
    %74 = vector.extract_strided_slice %1 {offsets = [0, 16], sizes = [8, 8], strides = [1, 1]} : vector<8x32xf32> to vector<8x8xf32>
    %75 = arith.truncf %74 : vector<8x8xf32> to vector<8x8xbf16>
    %76 = vector.extract_strided_slice %3 {offsets = [0, 16], sizes = [8, 8], strides = [1, 1]} : vector<8x32xf32> to vector<8x8xf32>
    %77 = arith.truncf %76 : vector<8x8xf32> to vector<8x8xbf16>
    %78 = vector.extract_strided_slice %5 {offsets = [0, 16], sizes = [8, 8], strides = [1, 1]} : vector<8x32xf32> to vector<8x8xf32>
    %79 = arith.truncf %78 : vector<8x8xf32> to vector<8x8xbf16>
    %cst_28 = arith.constant dense<0.000000e+00> : vector<8x8xf32>
    %80 = tpu.matmul %75, %77, %cst_28 {dimension_numbers = #tpu.dot_dimension_numbers<[1], [1], [0], [0], [0, 0, 1, 0], [], []>} : vector<8x8xbf16>, vector<8x8xbf16>, vector<8x8xf32> -> vector<8x8xf32>
    %cst_29 = arith.constant 0.353553385 : f32
    %81 = vector.broadcast %cst_29 : f32 to vector<8x8xf32>
    %82 = arith.mulf %80, %81 : vector<8x8xf32>
    %cst_30 = arith.constant 0.000000e+00 : f32
    %83 = vector.broadcast %cst_30 : f32 to vector<1x8xf32>
    %84 = arith.cmpf ogt, %7, %83 : vector<1x8xf32>
    %cst_31 = arith.constant -3.40282347E+38 : f32
    %85 = vector.shape_cast %84 : vector<1x8xi1> to vector<1x8xi1>
    %86 = vector.broadcast %85 : vector<1x8xi1> to vector<8x8xi1>
    %87 = vector.broadcast %cst_31 : f32 to vector<8x8xf32>
    %88 = arith.select %86, %82, %87 : vector<8x8xi1>, vector<8x8xf32>
    %cst_32 = arith.constant dense<0xFF800000> : vector<8xf32>
    %89 = vector.multi_reduction <maximumf>, %88, %cst_32 [1] : vector<8x8xf32> to vector<8xf32>
    %90 = vector.shape_cast %89 : vector<8xf32> to vector<8x1xf32>
    %91 = vector.broadcast %90 : vector<8x1xf32> to vector<8x8xf32>
    %92 = arith.subf %88, %91 : vector<8x8xf32>
    %93 = math.exp %92 : vector<8x8xf32>
    %cst_33 = arith.constant dense<0.000000e+00> : vector<8xf32>
    %94 = vector.multi_reduction <add>, %93, %cst_33 [1] : vector<8x8xf32> to vector<8xf32>
    %95 = vector.shape_cast %94 : vector<8xf32> to vector<8x1xf32>
    %96 = tpu.reciprocal %95 {approx = true} : vector<8x1xf32> -> vector<8x1xf32>
    %97 = vector.broadcast %96 : vector<8x1xf32> to vector<8x8xf32>
    %98 = arith.mulf %93, %97 : vector<8x8xf32>
    %cst_34 = arith.constant 0.000000e+00 : f32
    %99 = vector.broadcast %cst_34 : f32 to vector<1x8xf32>
    %100 = arith.cmpf ogt, %7, %99 : vector<1x8xf32>
    %cst_35 = arith.constant 0.000000e+00 : f32
    %101 = vector.shape_cast %100 : vector<1x8xi1> to vector<1x8xi1>
    %102 = vector.broadcast %101 : vector<1x8xi1> to vector<8x8xi1>
    %103 = vector.broadcast %cst_35 : f32 to vector<8x8xf32>
    %104 = arith.select %102, %98, %103 : vector<8x8xi1>, vector<8x8xf32>
    %105 = arith.truncf %104 : vector<8x8xf32> to vector<8x8xbf16>
    %cst_36 = arith.constant dense<0.000000e+00> : vector<8x8xf32>
    %106 = tpu.matmul %105, %79, %cst_36 {dimension_numbers = #tpu.dot_dimension_numbers<[1], [0], [0], [1], [0, 0, 1, 1], [], []>} : vector<8x8xbf16>, vector<8x8xbf16>, vector<8x8xf32> -> vector<8x8xf32>
    %107 = vector.extract_strided_slice %1 {offsets = [0, 24], sizes = [8, 8], strides = [1, 1]} : vector<8x32xf32> to vector<8x8xf32>
    %108 = arith.truncf %107 : vector<8x8xf32> to vector<8x8xbf16>
    %109 = vector.extract_strided_slice %3 {offsets = [0, 24], sizes = [8, 8], strides = [1, 1]} : vector<8x32xf32> to vector<8x8xf32>
    %110 = arith.truncf %109 : vector<8x8xf32> to vector<8x8xbf16>
    %111 = vector.extract_strided_slice %5 {offsets = [0, 24], sizes = [8, 8], strides = [1, 1]} : vector<8x32xf32> to vector<8x8xf32>
    %112 = arith.truncf %111 : vector<8x8xf32> to vector<8x8xbf16>
    %cst_37 = arith.constant dense<0.000000e+00> : vector<8x8xf32>
    %113 = tpu.matmul %108, %110, %cst_37 {dimension_numbers = #tpu.dot_dimension_numbers<[1], [1], [0], [0], [0, 0, 1, 0], [], []>} : vector<8x8xbf16>, vector<8x8xbf16>, vector<8x8xf32> -> vector<8x8xf32>
    %cst_38 = arith.constant 0.353553385 : f32
    %114 = vector.broadcast %cst_38 : f32 to vector<8x8xf32>
    %115 = arith.mulf %113, %114 : vector<8x8xf32>
    %cst_39 = arith.constant 0.000000e+00 : f32
    %116 = vector.broadcast %cst_39 : f32 to vector<1x8xf32>
    %117 = arith.cmpf ogt, %7, %116 : vector<1x8xf32>
    %cst_40 = arith.constant -3.40282347E+38 : f32
    %118 = vector.shape_cast %117 : vector<1x8xi1> to vector<1x8xi1>
    %119 = vector.broadcast %118 : vector<1x8xi1> to vector<8x8xi1>
    %120 = vector.broadcast %cst_40 : f32 to vector<8x8xf32>
    %121 = arith.select %119, %115, %120 : vector<8x8xi1>, vector<8x8xf32>
    %cst_41 = arith.constant dense<0xFF800000> : vector<8xf32>
    %122 = vector.multi_reduction <maximumf>, %121, %cst_41 [1] : vector<8x8xf32> to vector<8xf32>
    %123 = vector.shape_cast %122 : vector<8xf32> to vector<8x1xf32>
    %124 = vector.broadcast %123 : vector<8x1xf32> to vector<8x8xf32>
    %125 = arith.subf %121, %124 : vector<8x8xf32>
    %126 = math.exp %125 : vector<8x8xf32>
    %cst_42 = arith.constant dense<0.000000e+00> : vector<8xf32>
    %127 = vector.multi_reduction <add>, %126, %cst_42 [1] : vector<8x8xf32> to vector<8xf32>
    %128 = vector.shape_cast %127 : vector<8xf32> to vector<8x1xf32>
    %129 = tpu.reciprocal %128 {approx = true} : vector<8x1xf32> -> vector<8x1xf32>
    %130 = vector.broadcast %129 : vector<8x1xf32> to vector<8x8xf32>
    %131 = arith.mulf %126, %130 : vector<8x8xf32>
    %cst_43 = arith.constant 0.000000e+00 : f32
    %132 = vector.broadcast %cst_43 : f32 to vector<1x8xf32>
    %133 = arith.cmpf ogt, %7, %132 : vector<1x8xf32>
    %cst_44 = arith.constant 0.000000e+00 : f32
    %134 = vector.shape_cast %133 : vector<1x8xi1> to vector<1x8xi1>
    %135 = vector.broadcast %134 : vector<1x8xi1> to vector<8x8xi1>
    %136 = vector.broadcast %cst_44 : f32 to vector<8x8xf32>
    %137 = arith.select %135, %131, %136 : vector<8x8xi1>, vector<8x8xf32>
    %138 = arith.truncf %137 : vector<8x8xf32> to vector<8x8xbf16>
    %cst_45 = arith.constant dense<0.000000e+00> : vector<8x8xf32>
    %139 = tpu.matmul %138, %112, %cst_45 {dimension_numbers = #tpu.dot_dimension_numbers<[1], [0], [0], [1], [0, 0, 1, 1], [], []>} : vector<8x8xbf16>, vector<8x8xbf16>, vector<8x8xf32> -> vector<8x8xf32>
    %140 = tpu.concatenate %40, %73, %106, %139 in 1 : vector<8x8xf32>, vector<8x8xf32>, vector<8x8xf32>, vector<8x8xf32> -> vector<8x32xf32>
    %c0_46 = arith.constant 0 : index
    %c0_47 = arith.constant 0 : index
    %c0_48 = arith.constant 0 : index
    %141 = vector.load %arg5[%c0_46, %c0_47, %c0_48] : memref<1x8x32xf32, #tpu.memory_space<vmem>>, vector<1x8x32xf32>
    %142 = vector.shape_cast %141 : vector<1x8x32xf32> to vector<8x32xf32>
    %143 = vector.shape_cast %140 : vector<8x32xf32> to vector<1x8x32xf32>
    tpu.vector_store %arg5[%c0_46, %c0_47, %c0_48], %143 {strides = array<i32>} : memref<1x8x32xf32, #tpu.memory_space<vmem>>, vector<1x8x32xf32>,
    return
  }
  func.func @transform_0(%arg0: i32) -> (i32, i32, i32) {
    %c0_i32 = arith.constant 0 : i32
    %c0_i32_0 = arith.constant 0 : i32
    %c0_i32_1 = arith.constant 0 : i32
    return %arg0, %c0_i32, %c0_i32_0 : i32, i32, i32
  }
  func.func @transform_1(%arg0: i32) -> (i32, i32, i32) {
    %c0_i32 = arith.constant 0 : i32
    %c0_i32_0 = arith.constant 0 : i32
    %c0_i32_1 = arith.constant 0 : i32
    return %arg0, %c0_i32, %c0_i32_0 : i32, i32, i32
  }
  func.func @transform_2(%arg0: i32) -> (i32, i32, i32) {
    %c0_i32 = arith.constant 0 : i32
    %c0_i32_0 = arith.constant 0 : i32
    %c0_i32_1 = arith.constant 0 : i32
    return %arg0, %c0_i32, %c0_i32_0 : i32, i32, i32
  }
  func.func @transform_3(%arg0: i32) -> (i32, i32, i32) {
    %c0_i32 = arith.constant 0 : i32
    %c0_i32_0 = arith.constant 0 : i32
    %c0_i32_1 = arith.constant 0 : i32
    return %arg0, %c0_i32, %c0_i32_0 : i32, i32, i32
  }
  func.func @transform_4(%arg0: i32) -> (i32, i32, i32) {
    %c0_i32 = arith.constant 0 : i32
    %c0_i32_0 = arith.constant 0 : i32
    %c0_i32_1 = arith.constant 0 : i32
    return %arg0, %c0_i32, %c0_i32_0 : i32, i32, i32
  }
}

module attributes {stable_mosaic.version = 11 : i64} {
  func.func @_linear_residual_kernel(%arg0: i32, %arg1: memref<16x32xf32, #tpu.memory_space<vmem>>, %arg2: memref<32x32xbf16, #tpu.memory_space<vmem>>, %arg3: memref<1x32xf32, #tpu.memory_space<vmem>>, %arg4: memref<16x32xf32, #tpu.memory_space<vmem>>, %arg5: memref<16x32xf32, #tpu.memory_space<vmem>>) attributes {dimension_semantics = [#tpu.dimension_semantics<parallel>], iteration_bounds = array<i64: 1>, scalar_prefetch = 0 : i64, scratch_operands = 0 : i64, tpu.core_type = #tpu.core_type<tc>, window_params = [{transform_indices = @transform_0, window_bounds = array<i64: 16, 32>}, {pipeline_mode = #tpu.pipeline_mode<synchronous>, transform_indices = @transform_1, window_bounds = array<i64: 32, 32>}, {pipeline_mode = #tpu.pipeline_mode<synchronous>, transform_indices = @transform_2, window_bounds = array<i64: 1, 32>}, {transform_indices = @transform_3, window_bounds = array<i64: 16, 32>}, {transform_indices = @transform_4, window_bounds = array<i64: 16, 32>}]} {
    %c0 = arith.constant 0 : index
    %c0_0 = arith.constant 0 : index
    %0 = vector.load %arg1[%c0, %c0_0] : memref<16x32xf32, #tpu.memory_space<vmem>>, vector<16x32xf32>
    %1 = arith.truncf %0 : vector<16x32xf32> to vector<16x32xbf16>
    %c0_1 = arith.constant 0 : index
    %c0_2 = arith.constant 0 : index
    %2 = vector.load %arg2[%c0_1, %c0_2] : memref<32x32xbf16, #tpu.memory_space<vmem>>, vector<32x32xbf16>
    %cst = arith.constant dense<0.000000e+00> : vector<16x32xf32>
    %3 = tpu.matmul %1, %2, %cst {dimension_numbers = #tpu.dot_dimension_numbers<[1], [0], [0], [1], [0, 0, 1, 1], [], []>} : vector<16x32xbf16>, vector<32x32xbf16>, vector<16x32xf32> -> vector<16x32xf32>
    %c0_3 = arith.constant 0 : index
    %c0_4 = arith.constant 0 : index
    %4 = vector.load %arg3[%c0_3, %c0_4] : memref<1x32xf32, #tpu.memory_space<vmem>>, vector<1x32xf32>
    %5 = vector.broadcast %4 : vector<1x32xf32> to vector<16x32xf32>
    %6 = arith.addf %3, %5 : vector<16x32xf32>
    %c0_5 = arith.constant 0 : index
    %c0_6 = arith.constant 0 : index
    %7 = vector.load %arg4[%c0_5, %c0_6] : memref<16x32xf32, #tpu.memory_space<vmem>>, vector<16x32xf32>
    %8 = arith.addf %7, %6 : vector<16x32xf32>
    %c0_7 = arith.constant 0 : index
    %c0_8 = arith.constant 0 : index
    %9 = vector.load %arg5[%c0_7, %c0_8] : memref<16x32xf32, #tpu.memory_space<vmem>>, vector<16x32xf32>
    tpu.vector_store %arg5[%c0_7, %c0_8], %8 {strides = array<i32>} : memref<16x32xf32, #tpu.memory_space<vmem>>, vector<16x32xf32>,
    return
  }
  func.func @transform_0(%arg0: i32) -> (i32, i32) {
    %c0_i32 = arith.constant 0 : i32
    %c0_i32_0 = arith.constant 0 : i32
    return %arg0, %c0_i32 : i32, i32
  }
  func.func @transform_1(%arg0: i32) -> (i32, i32) {
    %c0_i32 = arith.constant 0 : i32
    %c0_i32_0 = arith.constant 0 : i32
    %c0_i32_1 = arith.constant 0 : i32
    return %c0_i32, %c0_i32_0 : i32, i32
  }
  func.func @transform_2(%arg0: i32) -> (i32, i32) {
    %c0_i32 = arith.constant 0 : i32
    %c0_i32_0 = arith.constant 0 : i32
    %c0_i32_1 = arith.constant 0 : i32
    return %c0_i32, %c0_i32_0 : i32, i32
  }
  func.func @transform_3(%arg0: i32) -> (i32, i32) {
    %c0_i32 = arith.constant 0 : i32
    %c0_i32_0 = arith.constant 0 : i32
    return %arg0, %c0_i32 : i32, i32
  }
  func.func @transform_4(%arg0: i32) -> (i32, i32) {
    %c0_i32 = arith.constant 0 : i32
    %c0_i32_0 = arith.constant 0 : i32
    return %arg0, %c0_i32 : i32, i32
  }
}

module attributes {stable_mosaic.version = 11 : i64} {
  func.func @_ln_linear_kernel(%arg0: i32, %arg1: memref<16x32xf32, #tpu.memory_space<vmem>>, %arg2: memref<1x32xf32, #tpu.memory_space<vmem>>, %arg3: memref<1x32xf32, #tpu.memory_space<vmem>>, %arg4: memref<32x64xbf16, #tpu.memory_space<vmem>>, %arg5: memref<1x64xf32, #tpu.memory_space<vmem>>, %arg6: memref<16x64xf32, #tpu.memory_space<vmem>>) attributes {dimension_semantics = [#tpu.dimension_semantics<parallel>], iteration_bounds = array<i64: 1>, scalar_prefetch = 0 : i64, scratch_operands = 0 : i64, tpu.core_type = #tpu.core_type<tc>, window_params = [{transform_indices = @transform_0, window_bounds = array<i64: 16, 32>}, {pipeline_mode = #tpu.pipeline_mode<synchronous>, transform_indices = @transform_1, window_bounds = array<i64: 1, 32>}, {pipeline_mode = #tpu.pipeline_mode<synchronous>, transform_indices = @transform_2, window_bounds = array<i64: 1, 32>}, {pipeline_mode = #tpu.pipeline_mode<synchronous>, transform_indices = @transform_3, window_bounds = array<i64: 32, 64>}, {pipeline_mode = #tpu.pipeline_mode<synchronous>, transform_indices = @transform_4, window_bounds = array<i64: 1, 64>}, {transform_indices = @transform_5, window_bounds = array<i64: 16, 64>}]} {
    %c0 = arith.constant 0 : index
    %c0_0 = arith.constant 0 : index
    %0 = vector.load %arg1[%c0, %c0_0] : memref<16x32xf32, #tpu.memory_space<vmem>>, vector<16x32xf32>
    %cst = arith.constant dense<0.000000e+00> : vector<16xf32>
    %1 = vector.multi_reduction <add>, %0, %cst [1] : vector<16x32xf32> to vector<16xf32>
    %2 = vector.shape_cast %1 : vector<16xf32> to vector<16x1xf32>
    %cst_1 = arith.constant 3.200000e+01 : f32
    %3 = vector.broadcast %cst_1 : f32 to vector<16x1xf32>
    %4 = arith.divf %2, %3 : vector<16x1xf32>
    %5 = vector.broadcast %4 : vector<16x1xf32> to vector<16x32xf32>
    %6 = arith.subf %0, %5 : vector<16x32xf32>
    %7 = arith.mulf %6, %6 : vector<16x32xf32>
    %cst_2 = arith.constant dense<0.000000e+00> : vector<16xf32>
    %8 = vector.multi_reduction <add>, %7, %cst_2 [1] : vector<16x32xf32> to vector<16xf32>
    %9 = vector.shape_cast %8 : vector<16xf32> to vector<16x1xf32>
    %cst_3 = arith.constant 3.200000e+01 : f32
    %10 = vector.broadcast %cst_3 : f32 to vector<16x1xf32>
    %11 = arith.divf %9, %10 : vector<16x1xf32>
    %12 = vector.broadcast %4 : vector<16x1xf32> to vector<16x32xf32>
    %13 = arith.subf %0, %12 : vector<16x32xf32>
    %cst_4 = arith.constant 9.99999996E-13 : f32
    %14 = vector.broadcast %cst_4 : f32 to vector<16x1xf32>
    %15 = arith.addf %11, %14 : vector<16x1xf32>
    %16 = math.rsqrt %15 : vector<16x1xf32>
    %17 = vector.broadcast %16 : vector<16x1xf32> to vector<16x32xf32>
    %18 = arith.mulf %13, %17 : vector<16x32xf32>
    %c0_5 = arith.constant 0 : index
    %c0_6 = arith.constant 0 : index
    %19 = vector.load %arg2[%c0_5, %c0_6] : memref<1x32xf32, #tpu.memory_space<vmem>>, vector<1x32xf32>
    %20 = vector.broadcast %19 : vector<1x32xf32> to vector<16x32xf32>
    %21 = arith.mulf %18, %20 : vector<16x32xf32>
    %c0_7 = arith.constant 0 : index
    %c0_8 = arith.constant 0 : index
    %22 = vector.load %arg3[%c0_7, %c0_8] : memref<1x32xf32, #tpu.memory_space<vmem>>, vector<1x32xf32>
    %23 = vector.broadcast %22 : vector<1x32xf32> to vector<16x32xf32>
    %24 = arith.addf %21, %23 : vector<16x32xf32>
    %25 = arith.truncf %24 : vector<16x32xf32> to vector<16x32xbf16>
    %c0_9 = arith.constant 0 : index
    %c0_10 = arith.constant 0 : index
    %26 = vector.load %arg4[%c0_9, %c0_10] : memref<32x64xbf16, #tpu.memory_space<vmem>>, vector<32x64xbf16>
    %cst_11 = arith.constant dense<0.000000e+00> : vector<16x64xf32>
    %27 = tpu.matmul %25, %26, %cst_11 {dimension_numbers = #tpu.dot_dimension_numbers<[1], [0], [0], [1], [0, 0, 1, 1], [], []>} : vector<16x32xbf16>, vector<32x64xbf16>, vector<16x64xf32> -> vector<16x64xf32>
    %c0_12 = arith.constant 0 : index
    %c0_13 = arith.constant 0 : index
    %28 = vector.load %arg5[%c0_12, %c0_13] : memref<1x64xf32, #tpu.memory_space<vmem>>, vector<1x64xf32>
    %29 = vector.broadcast %28 : vector<1x64xf32> to vector<16x64xf32>
    %30 = arith.addf %27, %29 : vector<16x64xf32>
    %cst_14 = arith.constant 0.000000e+00 : f32
    %31 = vector.broadcast %cst_14 : f32 to vector<16x64xf32>
    %32 = arith.maximumf %30, %31 : vector<16x64xf32>
    %c0_15 = arith.constant 0 : index
    %c0_16 = arith.constant 0 : index
    %33 = vector.load %arg6[%c0_15, %c0_16] : memref<16x64xf32, #tpu.memory_space<vmem>>, vector<16x64xf32>
    tpu.vector_store %arg6[%c0_15, %c0_16], %32 {strides = array<i32>} : memref<16x64xf32, #tpu.memory_space<vmem>>, vector<16x64xf32>,
    return
  }
  func.func @transform_0(%arg0: i32) -> (i32, i32) {
    %c0_i32 = arith.constant 0 : i32
    %c0_i32_0 = arith.constant 0 : i32
    return %arg0, %c0_i32 : i32, i32
  }
  func.func @transform_1(%arg0: i32) -> (i32, i32) {
    %c0_i32 = arith.constant 0 : i32
    %c0_i32_0 = arith.constant 0 : i32
    %c0_i32_1 = arith.constant 0 : i32
    return %c0_i32, %c0_i32_0 : i32, i32
  }
  func.func @transform_2(%arg0: i32) -> (i32, i32) {
    %c0_i32 = arith.constant 0 : i32
    %c0_i32_0 = arith.constant 0 : i32
    %c0_i32_1 = arith.constant 0 : i32
    return %c0_i32, %c0_i32_0 : i32, i32
  }
  func.func @transform_3(%arg0: i32) -> (i32, i32) {
    %c0_i32 = arith.constant 0 : i32
    %c0_i32_0 = arith.constant 0 : i32
    %c0_i32_1 = arith.constant 0 : i32
    return %c0_i32, %c0_i32_0 : i32, i32
  }
  func.func @transform_4(%arg0: i32) -> (i32, i32) {
    %c0_i32 = arith.constant 0 : i32
    %c0_i32_0 = arith.constant 0 : i32
    %c0_i32_1 = arith.constant 0 : i32
    return %c0_i32, %c0_i32_0 : i32, i32
  }
  func.func @transform_5(%arg0: i32) -> (i32, i32) {
    %c0_i32 = arith.constant 0 : i32
    %c0_i32_0 = arith.constant 0 : i32
    return %arg0, %c0_i32 : i32, i32
  }
}

module attributes {stable_mosaic.version = 11 : i64} {
  func.func @_layernorm_kernel(%arg0: i32, %arg1: memref<16x32xf32, #tpu.memory_space<vmem>>, %arg2: memref<1x32xf32, #tpu.memory_space<vmem>>, %arg3: memref<1x32xf32, #tpu.memory_space<vmem>>, %arg4: memref<16x32xf32, #tpu.memory_space<vmem>>) attributes {dimension_semantics = [#tpu.dimension_semantics<parallel>], iteration_bounds = array<i64: 1>, scalar_prefetch = 0 : i64, scratch_operands = 0 : i64, tpu.core_type = #tpu.core_type<tc>, window_params = [{transform_indices = @transform_0, window_bounds = array<i64: 16, 32>}, {pipeline_mode = #tpu.pipeline_mode<synchronous>, transform_indices = @transform_1, window_bounds = array<i64: 1, 32>}, {pipeline_mode = #tpu.pipeline_mode<synchronous>, transform_indices = @transform_2, window_bounds = array<i64: 1, 32>}, {transform_indices = @transform_3, window_bounds = array<i64: 16, 32>}]} {
    %c0 = arith.constant 0 : index
    %c0_0 = arith.constant 0 : index
    %0 = vector.load %arg1[%c0, %c0_0] : memref<16x32xf32, #tpu.memory_space<vmem>>, vector<16x32xf32>
    %cst = arith.constant dense<0.000000e+00> : vector<16xf32>
    %1 = vector.multi_reduction <add>, %0, %cst [1] : vector<16x32xf32> to vector<16xf32>
    %2 = vector.shape_cast %1 : vector<16xf32> to vector<16x1xf32>
    %cst_1 = arith.constant 3.200000e+01 : f32
    %3 = vector.broadcast %cst_1 : f32 to vector<16x1xf32>
    %4 = arith.divf %2, %3 : vector<16x1xf32>
    %5 = vector.broadcast %4 : vector<16x1xf32> to vector<16x32xf32>
    %6 = arith.subf %0, %5 : vector<16x32xf32>
    %7 = arith.mulf %6, %6 : vector<16x32xf32>
    %cst_2 = arith.constant dense<0.000000e+00> : vector<16xf32>
    %8 = vector.multi_reduction <add>, %7, %cst_2 [1] : vector<16x32xf32> to vector<16xf32>
    %9 = vector.shape_cast %8 : vector<16xf32> to vector<16x1xf32>
    %cst_3 = arith.constant 3.200000e+01 : f32
    %10 = vector.broadcast %cst_3 : f32 to vector<16x1xf32>
    %11 = arith.divf %9, %10 : vector<16x1xf32>
    %12 = vector.broadcast %4 : vector<16x1xf32> to vector<16x32xf32>
    %13 = arith.subf %0, %12 : vector<16x32xf32>
    %cst_4 = arith.constant 9.99999996E-13 : f32
    %14 = vector.broadcast %cst_4 : f32 to vector<16x1xf32>
    %15 = arith.addf %11, %14 : vector<16x1xf32>
    %16 = math.rsqrt %15 : vector<16x1xf32>
    %17 = vector.broadcast %16 : vector<16x1xf32> to vector<16x32xf32>
    %18 = arith.mulf %13, %17 : vector<16x32xf32>
    %c0_5 = arith.constant 0 : index
    %c0_6 = arith.constant 0 : index
    %19 = vector.load %arg2[%c0_5, %c0_6] : memref<1x32xf32, #tpu.memory_space<vmem>>, vector<1x32xf32>
    %20 = vector.broadcast %19 : vector<1x32xf32> to vector<16x32xf32>
    %21 = arith.mulf %18, %20 : vector<16x32xf32>
    %c0_7 = arith.constant 0 : index
    %c0_8 = arith.constant 0 : index
    %22 = vector.load %arg3[%c0_7, %c0_8] : memref<1x32xf32, #tpu.memory_space<vmem>>, vector<1x32xf32>
    %23 = vector.broadcast %22 : vector<1x32xf32> to vector<16x32xf32>
    %24 = arith.addf %21, %23 : vector<16x32xf32>
    %c0_9 = arith.constant 0 : index
    %c0_10 = arith.constant 0 : index
    %25 = vector.load %arg4[%c0_9, %c0_10] : memref<16x32xf32, #tpu.memory_space<vmem>>, vector<16x32xf32>
    tpu.vector_store %arg4[%c0_9, %c0_10], %24 {strides = array<i32>} : memref<16x32xf32, #tpu.memory_space<vmem>>, vector<16x32xf32>,
    return
  }
  func.func @transform_0(%arg0: i32) -> (i32, i32) {
    %c0_i32 = arith.constant 0 : i32
    %c0_i32_0 = arith.constant 0 : i32
    return %arg0, %c0_i32 : i32, i32
  }
  func.func @transform_1(%arg0: i32) -> (i32, i32) {
    %c0_i32 = arith.constant 0 : i32
    %c0_i32_0 = arith.constant 0 : i32
    %c0_i32_1 = arith.constant 0 : i32
    return %c0_i32, %c0_i32_0 : i32, i32
  }
  func.func @transform_2(%arg0: i32) -> (i32, i32) {
    %c0_i32 = arith.constant 0 : i32
    %c0_i32_0 = arith.constant 0 : i32
    %c0_i32_1 = arith.constant 0 : i32
    return %c0_i32, %c0_i32_0 : i32, i32
  }
  func.func @transform_3(%arg0: i32) -> (i32, i32) {
    %c0_i32 = arith.constant 0 : i32
    %c0_i32_0 = arith.constant 0 : i32
    return %arg0, %c0_i32 : i32, i32
  }
}

module attributes {stable_mosaic.version = 11 : i64} {
  func.func @_linear_residual_kernel(%arg0: i32, %arg1: memref<16x64xf32, #tpu.memory_space<vmem>>, %arg2: memref<64x32xbf16, #tpu.memory_space<vmem>>, %arg3: memref<1x32xf32, #tpu.memory_space<vmem>>, %arg4: memref<16x32xf32, #tpu.memory_space<vmem>>, %arg5: memref<16x32xf32, #tpu.memory_space<vmem>>) attributes {dimension_semantics = [#tpu.dimension_semantics<parallel>], iteration_bounds = array<i64: 1>, scalar_prefetch = 0 : i64, scratch_operands = 0 : i64, tpu.core_type = #tpu.core_type<tc>, window_params = [{transform_indices = @transform_0, window_bounds = array<i64: 16, 64>}, {pipeline_mode = #tpu.pipeline_mode<synchronous>, transform_indices = @transform_1, window_bounds = array<i64: 64, 32>}, {pipeline_mode = #tpu.pipeline_mode<synchronous>, transform_indices = @transform_2, window_bounds = array<i64: 1, 32>}, {transform_indices = @transform_3, window_bounds = array<i64: 16, 32>}, {transform_indices = @transform_4, window_bounds = array<i64: 16, 32>}]} {
    %c0 = arith.constant 0 : index
    %c0_0 = arith.constant 0 : index
    %0 = vector.load %arg1[%c0, %c0_0] : memref<16x64xf32, #tpu.memory_space<vmem>>, vector<16x64xf32>
    %1 = arith.truncf %0 : vector<16x64xf32> to vector<16x64xbf16>
    %c0_1 = arith.constant 0 : index
    %c0_2 = arith.constant 0 : index
    %2 = vector.load %arg2[%c0_1, %c0_2] : memref<64x32xbf16, #tpu.memory_space<vmem>>, vector<64x32xbf16>
    %cst = arith.constant dense<0.000000e+00> : vector<16x32xf32>
    %3 = tpu.matmul %1, %2, %cst {dimension_numbers = #tpu.dot_dimension_numbers<[1], [0], [0], [1], [0, 0, 1, 1], [], []>} : vector<16x64xbf16>, vector<64x32xbf16>, vector<16x32xf32> -> vector<16x32xf32>
    %c0_3 = arith.constant 0 : index
    %c0_4 = arith.constant 0 : index
    %4 = vector.load %arg3[%c0_3, %c0_4] : memref<1x32xf32, #tpu.memory_space<vmem>>, vector<1x32xf32>
    %5 = vector.broadcast %4 : vector<1x32xf32> to vector<16x32xf32>
    %6 = arith.addf %3, %5 : vector<16x32xf32>
    %c0_5 = arith.constant 0 : index
    %c0_6 = arith.constant 0 : index
    %7 = vector.load %arg4[%c0_5, %c0_6] : memref<16x32xf32, #tpu.memory_space<vmem>>, vector<16x32xf32>
    %8 = arith.addf %7, %6 : vector<16x32xf32>
    %c0_7 = arith.constant 0 : index
    %c0_8 = arith.constant 0 : index
    %9 = vector.load %arg5[%c0_7, %c0_8] : memref<16x32xf32, #tpu.memory_space<vmem>>, vector<16x32xf32>
    tpu.vector_store %arg5[%c0_7, %c0_8], %8 {strides = array<i32>} : memref<16x32xf32, #tpu.memory_space<vmem>>, vector<16x32xf32>,
    return
  }
  func.func @transform_0(%arg0: i32) -> (i32, i32) {
    %c0_i32 = arith.constant 0 : i32
    %c0_i32_0 = arith.constant 0 : i32
    return %arg0, %c0_i32 : i32, i32
  }
  func.func @transform_1(%arg0: i32) -> (i32, i32) {
    %c0_i32 = arith.constant 0 : i32
    %c0_i32_0 = arith.constant 0 : i32
    %c0_i32_1 = arith.constant 0 : i32
    return %c0_i32, %c0_i32_0 : i32, i32
  }
  func.func @transform_2(%arg0: i32) -> (i32, i32) {
    %c0_i32 = arith.constant 0 : i32
    %c0_i32_0 = arith.constant 0 : i32
    %c0_i32_1 = arith.constant 0 : i32
    return %c0_i32, %c0_i32_0 : i32, i32
  }
  func.func @transform_3(%arg0: i32) -> (i32, i32) {
    %c0_i32 = arith.constant 0 : i32
    %c0_i32_0 = arith.constant 0 : i32
    return %arg0, %c0_i32 : i32, i32
  }
  func.func @transform_4(%arg0: i32) -> (i32, i32) {
    %c0_i32 = arith.constant 0 : i32
    %c0_i32_0 = arith.constant 0 : i32
    return %arg0, %c0_i32 : i32, i32
  }
}

</mosaic_0001>

<llo_original>
// kernel: transformer_encoder_forward.13
$region0: #{transformer_encoder_forward.13}
  #allocation0 [shape = 'u32[]', space=smem, size = 0x4, offset = 0x4, fixed_abs, tag = 'smem constant byte address 0x4 - core index']
  #allocation1 [shape = 'u32[144,128]{1,0:T(1,128)}', space=vmem, size = 0x12000, scoped, tag = 'internal scratch']
  %s0 = inlined_call_operand.vmem [shape: f32[16,32], index: 0, kind: input, shape index: {}]
  %s1 = inlined_call_operand.vmem [shape: f32[1,32], index: 1, kind: input, shape index: {}]
  %s2 = inlined_call_operand.vmem [shape: f32[1,32], index: 2, kind: input, shape index: {}]
  %s3 = inlined_call_operand.vmem [shape: bf16[32,96], index: 3, kind: input, shape index: {}]
  %s4 = inlined_call_operand.vmem [shape: f32[1,96], index: 4, kind: input, shape index: {}]
  %s5 = inlined_call_operand.vmem [shape: f32[16,96], index: 5, kind: output, shape index: {}]
  %s6 = sld [smem:[#allocation0]]
  $region30: #{transformer_encoder_forward.13} parent=0
    _
  %s8 = ssub.s32 1, %s6
  %s9 = scalar_select 0, %s8, %s6
  // Predicated region
  $region2: #{transformer_encoder_forward.13} parent=0 // pred_check
    _
  $region3: #{transformer_encoder_forward.13} parent=0 // pred_check_branch
    %11 = sbr.rel (0) target = $region5
  $region4: #{transformer_encoder_forward.13} parent=0 // pred_region
    _
  $region5: #{transformer_encoder_forward.13} parent=0 // pred_fallthru
    _
  // Predicated region
  $region6: #{transformer_encoder_forward.13} parent=0 // pred_check
    _
  $region7: #{transformer_encoder_forward.13} parent=0 // pred_check_branch
    %13 = sbr.rel (0) target = $region9
  $region8: #{transformer_encoder_forward.13} parent=0 // pred_region
    _
  $region9: #{transformer_encoder_forward.13} parent=0 // pred_fallthru
    _
  // Predicated region
  $region10: #{transformer_encoder_forward.13} parent=0 // pred_check
    _
  $region11: #{transformer_encoder_forward.13} parent=0 // pred_check_branch
    %15 = sbr.rel (0) target = $region13
  $region12: #{transformer_encoder_forward.13} parent=0 // pred_region
    _
  $region13: #{transformer_encoder_forward.13} parent=0 // pred_fallthru
    _
  // Predicated region
  $region14: #{transformer_encoder_forward.13} parent=0 // pred_check
    _
  $region15: #{transformer_encoder_forward.13} parent=0 // pred_check_branch
    %17 = sbr.rel (0) target = $region17
  $region16: #{transformer_encoder_forward.13} parent=0 // pred_region
    _
  $region17: #{transformer_encoder_forward.13} parent=0 // pred_fallthru
    _
  // Predicated region
  $region18: #{transformer_encoder_forward.13} parent=0 // pred_check
    _
  $region19: #{transformer_encoder_forward.13} parent=0 // pred_check_branch
    %19 = sbr.rel (0) target = $region21
  $region20: #{transformer_encoder_forward.13} parent=0 // pred_region
    _
  $region21: #{transformer_encoder_forward.13} parent=0 // pred_fallthru
    _
  %v21 = vld [vmem:[%s0] sm:$0xff]
  %v22 = vld [vmem:[%s0 + $0x8] sm:$0xff]
  %vm23 = vcmask 261120
  %v24 = vsel %vm23, %v21, 0.0
  %25 = vadd.xlane.f32.xlu0 %v24
  %v26 = vpop.xlane.xlu0 %25
  %v27 = vsel %vm23, %v22, 0.0
  %28 = vadd.xlane.f32.xlu0 %v27
  %v29 = vpop.xlane.xlu0 %28
  %v30 = vrcp.pop 32.0
  %v31 = vmul.f32 %v26, %v30
  %v32 = vmul.f32 %v29, %v30
  %v33 = vsub.f32 %v21, %v31
  %v34 = vsub.f32 %v22, %v32
  %v35 = vmul.f32 %v33, %v33
  %v36 = vmul.f32 %v34, %v34
  %v37 = vsel %vm23, %v35, 0.0
  %38 = vadd.xlane.f32.xlu0 %v37
  %v39 = vpop.xlane.xlu0 %38
  %v40 = vsel %vm23, %v36, 0.0
  %41 = vadd.xlane.f32.xlu0 %v40
  %v42 = vpop.xlane.xlu0 %41
  %v43 = vmul.f32 %v39, %v30
  %v44 = vmul.f32 %v42, %v30
  %v45 = vadd.f32 %v43, 1e-12
  %v46 = vadd.f32 %v44, 1e-12
  %v47 = vrsqrt.pop %v45
  %v48 = vrsqrt.pop %v46
  %v49 = vmul.f32 %v33, %v47
  %v50 = vmul.f32 %v34, %v48
  %v51 = vld [vmem:[%s1] sm:$0x1]
  %v53 = vlaneseq
  %v54 = vshrl.u32 %v53, 7
  %v55 = vsub.s32 0, %v54
  %v56 = vrot.slane %v51, %v55
  %v58 = vmul.f32 %v49, %v56
  %v59 = vmul.f32 %v50, %v56
  %v60 = vld [vmem:[%s2] sm:$0x1]
  %v62 = vlaneseq
  %v63 = vshrl.u32 %v62, 7
  %v64 = vsub.s32 0, %v63
  %v65 = vrot.slane %v60, %v64
  %v67 = vadd.f32 %v58, %v65
  %v68 = vadd.f32 %v59, %v65
  %v69 = vpack.c.bf16 %v68, %v67
  %v70 = vld [vmem:[%s3] sm:$0xf]
  %v71 = vld [vmem:[%s3 + $0x4] sm:$0xf]
  %v72 = vld [vmem:[%s3 + $0x8] sm:$0xf]
  %v73 = vld [vmem:[%s3 + $0xc] sm:$0xf]
  %v74 = vld [vmem:[%s4] sm:$0x1]
  %v76 = vlaneseq
  %v77 = vshrl.u32 %v76, 7
  %v78 = vsub.s32 0, %v77
  %v79 = vrot.slane %v74, %v78
  %v85 = vunpack.c.l.b16 %v70
  %v86 = vunpack.c.l.b16 %v71
  %v87 = vunpack.c.l.b16 %v72
  %v88 = vunpack.c.l.b16 %v73
  %v89 = vpack.c.b16 %v86, %v85
  %v90 = vpack.c.b16 %v88, %v87
  %v94 = vsel %vm23, %v69, 0
  %96 = vmatprep.subr.bf16.mxu0 0
  %97 = vmatpush1.bf16.msra.mxu0 %v89
  %98 = vmatprep.subr.bf16.mxu0 0
  %99 = vmatpush1.bf16.msra.mxu0 %v90
  %100 = vmatprep.subr.bf16.mxu0 0
  %101 = vmatpush1.bf16.msra.mxu0 0
  %102 = vmatprep.subr.bf16.mxu0 0
  %103 = vmatpush1.bf16.msra.mxu0 0
  %104 = vmatprep.subr.bf16.mxu0 0
  %105 = vmatpush1.bf16.msra.mxu0 0
  %106 = vmatprep.subr.bf16.mxu0 0
  %107 = vmatpush1.bf16.msra.mxu0 0
  %108 = vmatprep.subr.bf16.mxu0 0
  %109 = vmatpush1.bf16.msra.mxu0 0
  %110 = vmatprep.subr.bf16.mxu0 0
  %111 = vmatpush1.bf16.msra.mxu0 0
  %112 = vmatprep.subr.bf16.mxu0 0
  %113 = vmatpush1.bf16.msra.mxu0 0
  %114 = vmatprep.subr.bf16.mxu0 0
  %115 = vmatpush1.bf16.msra.mxu0 0
  %116 = vmatprep.subr.bf16.mxu0 0
  %117 = vmatpush1.bf16.msra.mxu0 0
  %118 = vmatprep.subr.bf16.mxu0 0
  %119 = vmatpush1.bf16.msra.mxu0 0
  %120 = vmatprep.subr.bf16.mxu0 0
  %121 = vmatpush1.bf16.msra.mxu0 0
  %122 = vmatprep.subr.bf16.mxu0 0
  %123 = vmatpush1.bf16.msra.mxu0 0
  %124 = vmatprep.subr.bf16.mxu0 0
  %125 = vmatpush1.bf16.msra.mxu0 0
  %126 = vmatprep.subr.bf16.mxu0 0
  %127 = vmatpush1.bf16.msra.mxu0 0
  %128 = vmatprep.mubr.bf16.mxu0 0
  %129 = vmatmul.mubr.bf16.gmra.mrb[0].mxu0 %v94
  %v130 = vpop.f32.mrb[0].mxu0
  %v131 = vadd.f32 %v79, %v130
  %v132 = vpop.f32.mrb[0].mxu0
  %v133 = vpop.f32.mrb[0].mxu0
  %v134 = vadd.f32 %v79, %v133
  %v135 = vpop.f32.mrb[0].mxu0
  %136 = vdwg.mxu0
  %vm137 = vcmask 785408
  %138 = vst.msk [vmem:[%s5] sm:$0xff] %vm137, %v131
  %139 = vst.msk [vmem:[%s5 + $0x8] sm:$0xff] %vm137, %v134
  // Predicated region
  $region22: #{transformer_encoder_forward.13} parent=0 // pred_check
    _
  $region23: #{transformer_encoder_forward.13} parent=0 // pred_check_branch
    %141 = sbr.rel (0) target = $region25
  $region24: #{transformer_encoder_forward.13} parent=0 // pred_region
    _
  $region25: #{transformer_encoder_forward.13} parent=0 // pred_fallthru
    _
  // Predicated region
  $region26: #{transformer_encoder_forward.13} parent=0 // pred_check
    _
  $region27: #{transformer_encoder_forward.13} parent=0 // pred_check_branch
    %143 = sbr.rel (0) target = $region29
  $region28: #{transformer_encoder_forward.13} parent=0 // pred_region
    _
  $region29: #{transformer_encoder_forward.13} parent=0 // pred_fallthru
    _

// kernel: transformer_encoder_forward.12
$region0: #{transformer_encoder_forward.12}
  #allocation0 [shape = 'u32[]', space=smem, size = 0x4, offset = 0x4, fixed_abs, tag = 'smem constant byte address 0x4 - core index']
  #allocation1 [shape = 'u32[144,128]{1,0:T(1,128)}', space=vmem, size = 0x12000, scoped, tag = 'internal scratch']
  %s0 = inlined_call_operand.vmem [shape: f32[2,8,16], index: 0, kind: input, shape index: {}]
  %s1 = inlined_call_operand.vmem [shape: bf16[16,32], index: 1, kind: input, shape index: {}]
  %s2 = inlined_call_operand.vmem [shape: f32[1,32], index: 2, kind: input, shape index: {}]
  %s3 = inlined_call_operand.vmem [shape: f32[1,32], index: 3, kind: input, shape index: {}]
  %s4 = inlined_call_operand.vmem [shape: f32[1,32], index: 4, kind: input, shape index: {}]
  %s5 = inlined_call_operand.vmem [shape: f32[1,8,32], index: 5, kind: input, shape index: {}]
  %s6 = inlined_call_operand.vmem [shape: f32[2,8,32], index: 6, kind: output, shape index: {}]
  %s7 = sld [smem:[#allocation0]]
  $region57: #{transformer_encoder_forward.12} parent=0
    _
  %s9 = ssub.s32 1, %s7
  %s10 = scalar_select 0, %s9, %s7
  loop: start=0, step=1, limit=4
  $region2: #{transformer_encoder_forward.12} parent=0 // loop_pre_header
    _
  $region3: #{transformer_encoder_forward.12} parent=0 // loop_header
    %s12 = sphi 0, %s16
    %p13 = scmp.ge.s32.totalorder %s12, 4
    %s19 = sphi 0, %s31
    %s20 = sphi 0, %s27
    %s21 = sphi 0, %s19
    %s22 = sphi 0, %s20
    %s23 = sphi 0, %s21
    %s24 = sphi 0, %s22
    %s36 = sphi 0, %s38
    %s39 = sphi 0, %s36
    %s40 = sphi 0, %s39
    %s56 = sphi 0, %s40
    %s60 = sphi 0, %s60
    %s62 = sphi 0, %s60
    %s63 = sphi 0, %s62
    %s77 = sphi 0, %s63
    %s81 = sphi 0, %s81
    %s83 = sphi 0, %s81
    %s84 = sphi 0, %s83
    %s98 = sphi 0, %s84
    %s102 = sphi 0, %s102
    %s104 = sphi 0, %s102
    %s105 = sphi 0, %s104
    %s119 = sphi 0, %s105
    %s123 = sphi 0, %s123
    %s125 = sphi 0, %s123
    %s126 = sphi 0, %s125
    %s140 = sphi 0, %s126
    %s146 = sphi 0, %s148
    %s149 = sphi 0, %s146
    %s150 = sphi 0, %s149
    %s166 = sphi 0, %s150
    %s174 = sphi 0, %s176
    %s177 = sphi 0, %s174
    %s178 = sphi 0, %s177
    %s194 = sphi 0, %s178
  $region4: #{transformer_encoder_forward.12} parent=0 // loop_header_branch
    %15 = sbr.rel (%p13) target = $region8
  $region5: #{transformer_encoder_forward.12} parent=0 // loop_body
    %s17 = ssub.s32 %s12, 1
    %s18 = ssub.s32 %s12, 2
    %s25 = sadd.s32 1, %s20
    %p26 = scmp.ge.s32.totalorder %s25, 1
    %s27 = scalar_select %p26, 0, %s25
    %s28 = sadd.s32 1, %s19
    %s29 = scalar_select %p26, %s28, %s19
    %p30 = scmp.ge.s32.totalorder %s29, 2
    %s31 = scalar_select %p30, 0, %s29
    %s32 = ssub.s32 %s19, %s31
    %s33 = ssub.s32 %s20, %s27
    %s34 = sor.u32 %s32, %s33
    %p35 = scmp.eq.s32.totalorder %s34, 0
    %s37 = sadd.s32 %s36, 1
    %s38 = scalar_select %p35, %s36, %s37
    %p41 = pneg %p35
    %p42 = scmp.eq.s32.totalorder %s12, 1
    %p43 = por %p41, %p42
    %p44 = scmp.ne.s32.totalorder %s36, %s39
    %p45 = scmp.eq.s32.totalorder %s12, 0
    %p46 = por %p44, %p45
    %p47 = scmp.ne.s32.totalorder %s36, %s39
    %p48 = scmp.eq.s32.totalorder %s17, 1
    %p49 = por %p47, %p48
    %p50 = scmp.ne.s32.totalorder %s39, %s40
    %p51 = scmp.eq.s32.totalorder %s17, 0
    %p52 = por %p50, %p51
    %p53 = scmp.ne.s32.totalorder %s39, %s40
    %p54 = scmp.eq.s32.totalorder %s18, 1
    %p55 = por %p53, %p54
    %p57 = scmp.ne.s32.totalorder %s40, %s56
    %p58 = scmp.eq.s32.totalorder %s18, 0
    %p59 = por %p57, %p58
    %s61 = sadd.s32 %s60, 1
    %p64 = scmp.eq.s32.totalorder %s12, 1
    %p65 = scmp.ne.s32.totalorder %s60, %s62
    %p66 = scmp.eq.s32.totalorder %s12, 0
    %p67 = por %p65, %p66
    %p68 = scmp.ne.s32.totalorder %s60, %s62
    %p69 = scmp.eq.s32.totalorder %s17, 1
    %p70 = por %p68, %p69
    %p71 = scmp.ne.s32.totalorder %s62, %s63
    %p72 = scmp.eq.s32.totalorder %s17, 0
    %p73 = por %p71, %p72
    %p74 = scmp.ne.s32.totalorder %s62, %s63
    %p75 = scmp.eq.s32.totalorder %s18, 1
    %p76 = por %p74, %p75
    %p78 = scmp.ne.s32.totalorder %s63, %s77
    %p79 = scmp.eq.s32.totalorder %s18, 0
    %p80 = por %p78, %p79
    %s82 = sadd.s32 %s81, 1
    %p85 = scmp.eq.s32.totalorder %s12, 1
    %p86 = scmp.ne.s32.totalorder %s81, %s83
    %p87 = scmp.eq.s32.totalorder %s12, 0
    %p88 = por %p86, %p87
    %p89 = scmp.ne.s32.totalorder %s81, %s83
    %p90 = scmp.eq.s32.totalorder %s17, 1
    %p91 = por %p89, %p90
    %p92 = scmp.ne.s32.totalorder %s83, %s84
    %p93 = scmp.eq.s32.totalorder %s17, 0
    %p94 = por %p92, %p93
    %p95 = scmp.ne.s32.totalorder %s83, %s84
    %p96 = scmp.eq.s32.totalorder %s18, 1
    %p97 = por %p95, %p96
    %p99 = scmp.ne.s32.totalorder %s84, %s98
    %p100 = scmp.eq.s32.totalorder %s18, 0
    %p101 = por %p99, %p100
    %s103 = sadd.s32 %s102, 1
    %p106 = scmp.eq.s32.totalorder %s12, 1
    %p107 = scmp.ne.s32.totalorder %s102, %s104
    %p108 = scmp.eq.s32.totalorder %s12, 0
    %p109 = por %p107, %p108
    %p110 = scmp.ne.s32.totalorder %s102, %s104
    %p111 = scmp.eq.s32.totalorder %s17, 1
    %p112 = por %p110, %p111
    %p113 = scmp.ne.s32.totalorder %s104, %s105
    %p114 = scmp.eq.s32.totalorder %s17, 0
    %p115 = por %p113, %p114
    %p116 = scmp.ne.s32.totalorder %s104, %s105
    %p117 = scmp.eq.s32.totalorder %s18, 1
    %p118 = por %p116, %p117
    %p120 = scmp.ne.s32.totalorder %s105, %s119
    %p121 = scmp.eq.s32.totalorder %s18, 0
    %p122 = por %p120, %p121
    %s124 = sadd.s32 %s123, 1
    %p127 = scmp.eq.s32.totalorder %s12, 1
    %p128 = scmp.ne.s32.totalorder %s123, %s125
    %p129 = scmp.eq.s32.totalorder %s12, 0
    %p130 = por %p128, %p129
    %p131 = scmp.ne.s32.totalorder %s123, %s125
    %p132 = scmp.eq.s32.totalorder %s17, 1
    %p133 = por %p131, %p132
    %p134 = scmp.ne.s32.totalorder %s125, %s126
    %p135 = scmp.eq.s32.totalorder %s17, 0
    %p136 = por %p134, %p135
    %p137 = scmp.ne.s32.totalorder %s125, %s126
    %p138 = scmp.eq.s32.totalorder %s18, 1
    %p139 = por %p137, %p138
    %p141 = scmp.ne.s32.totalorder %s126, %s140
    %p142 = scmp.eq.s32.totalorder %s18, 0
    %p143 = por %p141, %p142
    %s144 = ssub.s32 %s20, %s27
    %p145 = scmp.eq.s32.totalorder %s144, 0
    %s147 = sadd.s32 %s146, 1
    %s148 = scalar_select %p145, %s146, %s147
    %p151 = pneg %p145
    %p152 = scmp.eq.s32.totalorder %s12, 1
    %p153 = por %p151, %p152
    %p154 = scmp.ne.s32.totalorder %s146, %s149
    %p155 = scmp.eq.s32.totalorder %s12, 0
    %p156 = por %p154, %p155
    %p157 = scmp.ne.s32.totalorder %s146, %s149
    %p158 = scmp.eq.s32.totalorder %s17, 1
    %p159 = por %p157, %p158
    %p160 = scmp.ne.s32.totalorder %s149, %s150
    %p161 = scmp.eq.s32.totalorder %s17, 0
    %p162 = por %p160, %p161
    %p163 = scmp.ne.s32.totalorder %s149, %s150
    %p164 = scmp.eq.s32.totalorder %s18, 1
    %p165 = por %p163, %p164
    %p167 = scmp.ne.s32.totalorder %s150, %s166
    %p168 = scmp.eq.s32.totalorder %s18, 0
    %p169 = por %p167, %p168
    %s170 = ssub.s32 %s19, %s31
    %s171 = ssub.s32 %s20, %s27
    %s172 = sor.u32 %s170, %s171
    %p173 = scmp.eq.s32.totalorder %s172, 0
    %s175 = sadd.s32 %s174, 1
    %s176 = scalar_select %p173, %s174, %s175
    %p179 = pneg %p173
    %p180 = scmp.eq.s32.totalorder %s12, 1
    %p181 = por %p179, %p180
    %p182 = scmp.ne.s32.totalorder %s174, %s177
    %p183 = scmp.eq.s32.totalorder %s12, 0
    %p184 = por %p182, %p183
    %p185 = scmp.ne.s32.totalorder %s174, %s177
    %p186 = scmp.eq.s32.totalorder %s17, 1
    %p187 = por %p185, %p186
    %p188 = scmp.ne.s32.totalorder %s177, %s178
    %p189 = scmp.eq.s32.totalorder %s17, 0
    %p190 = por %p188, %p189
    %p191 = scmp.ne.s32.totalorder %s177, %s178
    %p192 = scmp.eq.s32.totalorder %s18, 1
    %p193 = por %p191, %p192
    %p195 = scmp.ne.s32.totalorder %s178, %s194
    %p196 = scmp.eq.s32.totalorder %s18, 0
    %p197 = por %p195, %p196
    %p198 = scmp.le.s32.totalorder 1, %s12
    %p199 = scmp.lt.s32.totalorder %s12, 3
    %p200 = pnand %p198, %p199
    %p201 = pneg %p200
    // Predicated region
    $region9: #{transformer_encoder_forward.12} parent=5 // pred_check
      _
    $region10: #{transformer_encoder_forward.12} parent=5 // pred_check_branch
      %203 = sbr.rel (%p200) target = $region12
    $region11: #{transformer_encoder_forward.12} parent=5 // pred_region
      %s204 = ssub.s32 %s12, 1
      // Predicated region
      $region13: #{transformer_encoder_forward.12} parent=11 // pred_check
        %p205 = pneg %p73
      $region14: #{transformer_encoder_forward.12} parent=11 // pred_check_branch
        %207 = sbr.rel (%p205) target = $region16
      $region15: #{transformer_encoder_forward.12} parent=11 // pred_region
        _
      $region16: #{transformer_encoder_forward.12} parent=11 // pred_fallthru
        _
      // Predicated region
      $region17: #{transformer_encoder_forward.12} parent=11 // pred_check
        %p208 = pneg %p94
      $region18: #{transformer_encoder_forward.12} parent=11 // pred_check_branch
        %210 = sbr.rel (%p208) target = $region20
      $region19: #{transformer_encoder_forward.12} parent=11 // pred_region
        _
      $region20: #{transformer_encoder_forward.12} parent=11 // pred_fallthru
        _
      // Predicated region
      $region21: #{transformer_encoder_forward.12} parent=11 // pred_check
        %p211 = pneg %p115
      $region22: #{transformer_encoder_forward.12} parent=11 // pred_check_branch
        %213 = sbr.rel (%p211) target = $region24
      $region23: #{transformer_encoder_forward.12} parent=11 // pred_region
        _
      $region24: #{transformer_encoder_forward.12} parent=11 // pred_fallthru
        _
      // Predicated region
      $region25: #{transformer_encoder_forward.12} parent=11 // pred_check
        %p214 = pneg %p136
      $region26: #{transformer_encoder_forward.12} parent=11 // pred_check_branch
        %216 = sbr.rel (%p214) target = $region28
      $region27: #{transformer_encoder_forward.12} parent=11 // pred_region
        _
      $region28: #{transformer_encoder_forward.12} parent=11 // pred_fallthru
        _
      // Predicated region
      $region29: #{transformer_encoder_forward.12} parent=11 // pred_check
        %p217 = pneg %p162
      $region30: #{transformer_encoder_forward.12} parent=11 // pred_check_branch
        %219 = sbr.rel (%p217) target = $region32
      $region31: #{transformer_encoder_forward.12} parent=11 // pred_region
        %p220 = scmp.lt.s32.totalorder %s22, 0
        %s221 = scalar_select %p220, %s22, 0
        %s222 = smul.addr %s221, 8
        %s223 = scalar_lea.vmem %s5, %s222
      $region32: #{transformer_encoder_forward.12} parent=11 // pred_fallthru
        _
    $region12: #{transformer_encoder_forward.12} parent=5 // pred_fallthru
      _
    %p224 = scmp.lt.s32.totalorder %s12, 2
    // Predicated region
    $region33: #{transformer_encoder_forward.12} parent=5 // pred_check
      %p225 = pneg %p224
    $region34: #{transformer_encoder_forward.12} parent=5 // pred_check_branch
      %227 = sbr.rel (%p225) target = $region36
    $region35: #{transformer_encoder_forward.12} parent=5 // pred_region
      // Predicated region
      $region37: #{transformer_encoder_forward.12} parent=35 // pred_check
        %p228 = pneg %p46
      $region38: #{transformer_encoder_forward.12} parent=35 // pred_check_branch
        %230 = sbr.rel (%p228) target = $region40
      $region39: #{transformer_encoder_forward.12} parent=35 // pred_region
        %p231 = scmp.lt.s32.totalorder %s19, 1
        %s232 = scalar_select %p231, %s19, 1
        %p233 = scmp.lt.s32.totalorder %s20, 0
        %s234 = scalar_select %p233, %s20, 0
        %s235 = sadd.s32 %s234, %s232
        %s236 = smul.addr %s235, 8
        %s237 = scalar_lea.vmem %s0, %s236
      $region40: #{transformer_encoder_forward.12} parent=35 // pred_fallthru
        _
    $region36: #{transformer_encoder_forward.12} parent=5 // pred_fallthru
      _
    %p238 = scmp.le.s32.totalorder 1, %s12
    %p239 = scmp.lt.s32.totalorder %s12, 3
    %p240 = pnand %p238, %p239
    %p241 = pneg %p240
    // Predicated region
    $region41: #{transformer_encoder_forward.12} parent=5 // pred_check
      _
    $region42: #{transformer_encoder_forward.12} parent=5 // pred_check_branch
      %243 = sbr.rel (%p240) target = $region44
    $region43: #{transformer_encoder_forward.12} parent=5 // pred_region
      %s244 = ssub.s32 %s12, 1
      %p245 = scmp.lt.s32.totalorder %s21, 1
      %s246 = scalar_select %p245, %s21, 1
      %p247 = scmp.lt.s32.totalorder %s22, 0
      %s248 = scalar_select %p247, %s22, 0
      %s249 = sadd.s32 %s248, %s246
      %s250 = smul.addr %s249, 8
      %s251 = scalar_lea.vmem %s0, %s250
      %p252 = pneg %p52
      %p253 = pneg %p49
      %p254 = pneg %p73
      %p255 = pneg %p70
      %p256 = pneg %p94
      %p257 = pneg %p91
      %p258 = pneg %p115
      %p259 = pneg %p112
      %p260 = pneg %p136
      %p261 = pneg %p133
      %p262 = scmp.lt.s32.totalorder %s22, 0
      %s263 = scalar_select %p262, %s22, 0
      %s264 = smul.addr %s263, 8
      %s265 = scalar_lea.vmem %s5, %s264
      %p266 = pneg %p162
      %p267 = pneg %p159
      %p268 = pneg %p190
      %p269 = pneg %p187
      %p270 = scmp.lt.s32.totalorder %s21, 1
      %s271 = scalar_select %p270, %s21, 1
      %p272 = scmp.lt.s32.totalorder %s22, 0
      %s273 = scalar_select %p272, %s22, 0
      %s274 = sadd.s32 %s273, %s271
      %s275 = smul.addr %s274, 8
      %s276 = scalar_lea.vmem %s6, %s275
      %p277 = scmp.lt.s32.totalorder %s21, 1
      %s278 = scalar_select %p277, %s21, 1
      %p279 = scmp.lt.s32.totalorder %s22, 0
      %s280 = scalar_select %p279, %s22, 0
      %s281 = sadd.s32 %s280, %s278
      %s282 = smul.addr %s281, 8
      %s283 = scalar_lea.vmem %s0, %s282
      %p284 = scmp.lt.s32.totalorder %s22, 0
      %s285 = scalar_select %p284, %s22, 0
      %s286 = smul.addr %s285, 8
      %s287 = scalar_lea.vmem %s5, %s286
      %p288 = scmp.lt.s32.totalorder %s21, 1
      %s289 = scalar_select %p288, %s21, 1
      %p290 = scmp.lt.s32.totalorder %s22, 0
      %s291 = scalar_select %p290, %s22, 0
      %s292 = sadd.s32 %s291, %s289
      %s293 = smul.addr %s292, 8
      %s294 = scalar_lea.vmem %s6, %s293
      %v296 = vld [vmem:[%s283] sm:$0xff]
      %v297 = vpack.c.bf16 %v296, %v296
      %v298 = vld [vmem:[%s1] sm:$0xf]
      %v299 = vld [vmem:[%s1 + $0x4] sm:$0xf]
      %v300 = vld [vmem:[%s2] sm:$0x1]
      %v302 = vlaneseq
      %v303 = vshrl.u32 %v302, 7
      %v304 = vsub.s32 0, %v303
      %v305 = vrot.slane %v300, %v304
      %v309 = vunpack.c.l.b16 %v298
      %v310 = vunpack.c.l.b16 %v299
      %v311 = vpack.c.b16 %v310, %v309
      %vm313 = vcmask 130048
      %v315 = vsel %vm313, %v297, 0
      %317 = vmatprep.subr.bf16.mxu0 0
      %318 = vmatpush1.bf16.msra.mxu0 %v311
      %319 = vmatprep.subr.bf16.mxu0 0
      %320 = vmatpush1.bf16.msra.mxu0 0
      %321 = vmatprep.subr.bf16.mxu0 0
      %322 = vmatpush1.bf16.msra.mxu0 0
      %323 = vmatprep.subr.bf16.mxu0 0
      %324 = vmatpush1.bf16.msra.mxu0 0
      %325 = vmatprep.subr.bf16.mxu0 0
      %326 = vmatpush1.bf16.msra.mxu0 0
      %327 = vmatprep.subr.bf16.mxu0 0
      %328 = vmatpush1.bf16.msra.mxu0 0
      %329 = vmatprep.subr.bf16.mxu0 0
      %330 = vmatpush1.bf16.msra.mxu0 0
      %331 = vmatprep.subr.bf16.mxu0 0
      %332 = vmatpush1.bf16.msra.mxu0 0
      %333 = vmatprep.subr.bf16.mxu0 0
      %334 = vmatpush1.bf16.msra.mxu0 0
      %335 = vmatprep.subr.bf16.mxu0 0
      %336 = vmatpush1.bf16.msra.mxu0 0
      %337 = vmatprep.subr.bf16.mxu0 0
      %338 = vmatpush1.bf16.msra.mxu0 0
      %339 = vmatprep.subr.bf16.mxu0 0
      %340 = vmatpush1.bf16.msra.mxu0 0
      %341 = vmatprep.subr.bf16.mxu0 0
      %342 = vmatpush1.bf16.msra.mxu0 0
      %343 = vmatprep.subr.bf16.mxu0 0
      %344 = vmatpush1.bf16.msra.mxu0 0
      %345 = vmatprep.subr.bf16.mxu0 0
      %346 = vmatpush1.bf16.msra.mxu0 0
      %347 = vmatprep.subr.bf16.mxu0 0
      %348 = vmatpush1.bf16.msra.mxu0 0
      %349 = vmatprep.mubr.bf16.mxu0 0
      %350 = vmatmul.mubr.bf16.gmra.mrb[0].mxu0 %v315
      %v351 = vpop.f32.mrb[0].mxu0
      %v352 = vadd.f32 %v305, %v351
      %v353 = vpop.f32.mrb[0].mxu0
      %v354 = vpop.f32.mrb[0].mxu0
      %v355 = vpop.f32.mrb[0].mxu0
      %356 = vdwg.mxu0
      %vm357 = vcmask 261120
      %v358 = vsel %vm357, %v352, 0.0
      %359 = vadd.xlane.f32.xlu0 %v358
      %v360 = vpop.xlane.xlu0 %359
      %v361 = vrcp.pop 32.0
      %v362 = vmul.f32 %v360, %v361
      %v363 = vsub.f32 %v352, %v362
      %v364 = vmul.f32 %v363, %v363
      %v365 = vsel %vm357, %v364, 0.0
      %366 = vadd.xlane.f32.xlu0 %v365
      %v367 = vpop.xlane.xlu0 %366
      %v368 = vmul.f32 %v367, %v361
      %v369 = vadd.f32 %v368, 1e-05
      %v370 = vrsqrt.pop %v369
      %v371 = vmul.f32 %v363, %v370
      %v372 = vld [vmem:[%s3] sm:$0x1]
      %v374 = vlaneseq
      %v375 = vshrl.u32 %v374, 7
      %v376 = vsub.s32 0, %v375
      %v377 = vrot.slane %v372, %v376
      %v379 = vmul.f32 %v371, %v377
      %v380 = vld [vmem:[%s4] sm:$0x1]
      %v382 = vlaneseq
      %v383 = vshrl.u32 %v382, 7
      %v384 = vsub.s32 0, %v383
      %v385 = vrot.slane %v380, %v384
      %v387 = vadd.f32 %v379, %v385
      %v388 = vmax.f32 %v387, 0.0
      %v389 = vmul.f32 %v388, 5.656854
      %v390 = vld [vmem:[%s287] sm:$0xff]
      %v391 = vadd.f32 %v389, %v390
      %392 = vst.msk [vmem:[%s294] sm:$0xff] %vm357, %v391
      %p393 = scmp.lt.s32.totalorder %s21, 1
      %s394 = scalar_select %p393, %s21, 1
      %p395 = scmp.lt.s32.totalorder %s22, 0
      %s396 = scalar_select %p395, %s22, 0
      %s397 = sadd.s32 %s396, %s394
      %s398 = smul.addr %s397, 8
      %s399 = scalar_lea.vmem %s6, %s398
      // Predicated region
      $region45: #{transformer_encoder_forward.12} parent=43 // pred_check
        %p400 = pneg %p187
      $region46: #{transformer_encoder_forward.12} parent=43 // pred_check_branch
        %402 = sbr.rel (%p400) target = $region48
      $region47: #{transformer_encoder_forward.12} parent=43 // pred_region
        _
      $region48: #{transformer_encoder_forward.12} parent=43 // pred_fallthru
        _
    $region44: #{transformer_encoder_forward.12} parent=5 // pred_fallthru
      _
    %p403 = scmp.le.s32.totalorder 2, %s12
    // Predicated region
    $region49: #{transformer_encoder_forward.12} parent=5 // pred_check
      %p404 = pneg %p403
    $region50: #{transformer_encoder_forward.12} parent=5 // pred_check_branch
      %406 = sbr.rel (%p404) target = $region52
    $region51: #{transformer_encoder_forward.12} parent=5 // pred_region
      %s407 = ssub.s32 %s12, 2
      // Predicated region
      $region53: #{transformer_encoder_forward.12} parent=51 // pred_check
        %p408 = pneg %p193
      $region54: #{transformer_encoder_forward.12} parent=51 // pred_check_branch
        %410 = sbr.rel (%p408) target = $region56
      $region55: #{transformer_encoder_forward.12} parent=51 // pred_region
        %p411 = scmp.lt.s32.totalorder %s23, 1
        %s412 = scalar_select %p411, %s23, 1
        %p413 = scmp.lt.s32.totalorder %s24, 0
        %s414 = scalar_select %p413, %s24, 0
        %s415 = sadd.s32 %s414, %s412
        %s416 = smul.addr %s415, 8
        %s417 = scalar_lea.vmem %s6, %s416
      $region56: #{transformer_encoder_forward.12} parent=51 // pred_fallthru
        _
    $region52: #{transformer_encoder_forward.12} parent=5 // pred_fallthru
      _
  $region6: #{transformer_encoder_forward.12} parent=0 // loop_footer
    %s16 = sadd.s32 1, %s12
  $region7: #{transformer_encoder_forward.12} parent=0 // loop_footer_branch
    %11 = sbr.rel target = $region3
  $region8: #{transformer_encoder_forward.12} parent=0 // loop_exit
    _

// kernel: transformer_encoder_forward.15
$region0: #{transformer_encoder_forward.15}
  #allocation0 [shape = 'u32[]', space=smem, size = 0x4, offset = 0x4, fixed_abs, tag = 'smem constant byte address 0x4 - core index']
  #allocation1 [shape = 'u32[144,128]{1,0:T(1,128)}', space=vmem, size = 0x12000, scoped, tag = 'internal scratch']
  %s0 = inlined_call_operand.vmem [shape: f32[16,32], index: 0, kind: input, shape index: {}]
  %s1 = inlined_call_operand.vmem [shape: bf16[32,32], index: 1, kind: input, shape index: {}]
  %s2 = inlined_call_operand.vmem [shape: f32[1,32], index: 2, kind: input, shape index: {}]
  %s3 = inlined_call_operand.vmem [shape: f32[16,32], index: 3, kind: input, shape index: {}]
  %s4 = inlined_call_operand.vmem [shape: f32[16,32], index: 4, kind: output, shape index: {}]
  %s5 = sld [smem:[#allocation0]]
  $region26: #{transformer_encoder_forward.15} parent=0
    _
  %s7 = ssub.s32 1, %s5
  %s8 = scalar_select 0, %s7, %s5
  // Predicated region
  $region2: #{transformer_encoder_forward.15} parent=0 // pred_check
    _
  $region3: #{transformer_encoder_forward.15} parent=0 // pred_check_branch
    %10 = sbr.rel (0) target = $region5
  $region4: #{transformer_encoder_forward.15} parent=0 // pred_region
    _
  $region5: #{transformer_encoder_forward.15} parent=0 // pred_fallthru
    _
  // Predicated region
  $region6: #{transformer_encoder_forward.15} parent=0 // pred_check
    _
  $region7: #{transformer_encoder_forward.15} parent=0 // pred_check_branch
    %12 = sbr.rel (0) target = $region9
  $region8: #{transformer_encoder_forward.15} parent=0 // pred_region
    _
  $region9: #{transformer_encoder_forward.15} parent=0 // pred_fallthru
    _
  // Predicated region
  $region10: #{transformer_encoder_forward.15} parent=0 // pred_check
    _
  $region11: #{transformer_encoder_forward.15} parent=0 // pred_check_branch
    %14 = sbr.rel (0) target = $region13
  $region12: #{transformer_encoder_forward.15} parent=0 // pred_region
    _
  $region13: #{transformer_encoder_forward.15} parent=0 // pred_fallthru
    _
  // Predicated region
  $region14: #{transformer_encoder_forward.15} parent=0 // pred_check
    _
  $region15: #{transformer_encoder_forward.15} parent=0 // pred_check_branch
    %16 = sbr.rel (0) target = $region17
  $region16: #{transformer_encoder_forward.15} parent=0 // pred_region
    _
  $region17: #{transformer_encoder_forward.15} parent=0 // pred_fallthru
    _
  %v18 = vld [vmem:[%s0] sm:$0xff]
  %v19 = vld [vmem:[%s0 + $0x8] sm:$0xff]
  %v20 = vpack.c.bf16 %v19, %v18
  %v21 = vld [vmem:[%s1] sm:$0xf]
  %v22 = vld [vmem:[%s1 + $0x4] sm:$0xf]
  %v23 = vld [vmem:[%s1 + $0x8] sm:$0xf]
  %v24 = vld [vmem:[%s1 + $0xc] sm:$0xf]
  %v25 = vld [vmem:[%s2] sm:$0x1]
  %v27 = vlaneseq
  %v28 = vshrl.u32 %v27, 7
  %v29 = vsub.s32 0, %v28
  %v30 = vrot.slane %v25, %v29
  %v36 = vunpack.c.l.b16 %v21
  %v37 = vunpack.c.l.b16 %v22
  %v38 = vunpack.c.l.b16 %v23
  %v39 = vunpack.c.l.b16 %v24
  %v40 = vpack.c.b16 %v37, %v36
  %v41 = vpack.c.b16 %v39, %v38
  %vm44 = vcmask 261120
  %v46 = vsel %vm44, %v20, 0
  %48 = vmatprep.subr.bf16.mxu0 0
  %49 = vmatpush1.bf16.msra.mxu0 %v40
  %50 = vmatprep.subr.bf16.mxu0 0
  %51 = vmatpush1.bf16.msra.mxu0 %v41
  %52 = vmatprep.subr.bf16.mxu0 0
  %53 = vmatpush1.bf16.msra.mxu0 0
  %54 = vmatprep.subr.bf16.mxu0 0
  %55 = vmatpush1.bf16.msra.mxu0 0
  %56 = vmatprep.subr.bf16.mxu0 0
  %57 = vmatpush1.bf16.msra.mxu0 0
  %58 = vmatprep.subr.bf16.mxu0 0
  %59 = vmatpush1.bf16.msra.mxu0 0
  %60 = vmatprep.subr.bf16.mxu0 0
  %61 = vmatpush1.bf16.msra.mxu0 0
  %62 = vmatprep.subr.bf16.mxu0 0
  %63 = vmatpush1.bf16.msra.mxu0 0
  %64 = vmatprep.subr.bf16.mxu0 0
  %65 = vmatpush1.bf16.msra.mxu0 0
  %66 = vmatprep.subr.bf16.mxu0 0
  %67 = vmatpush1.bf16.msra.mxu0 0
  %68 = vmatprep.subr.bf16.mxu0 0
  %69 = vmatpush1.bf16.msra.mxu0 0
  %70 = vmatprep.subr.bf16.mxu0 0
  %71 = vmatpush1.bf16.msra.mxu0 0
  %72 = vmatprep.subr.bf16.mxu0 0
  %73 = vmatpush1.bf16.msra.mxu0 0
  %74 = vmatprep.subr.bf16.mxu0 0
  %75 = vmatpush1.bf16.msra.mxu0 0
  %76 = vmatprep.subr.bf16.mxu0 0
  %77 = vmatpush1.bf16.msra.mxu0 0
  %78 = vmatprep.subr.bf16.mxu0 0
  %79 = vmatpush1.bf16.msra.mxu0 0
  %80 = vmatprep.mubr.bf16.mxu0 0
  %81 = vmatmul.mubr.bf16.gmra.mrb[0].mxu0 %v46
  %v82 = vpop.f32.mrb[0].mxu0
  %v83 = vadd.f32 %v30, %v82
  %v84 = vpop.f32.mrb[0].mxu0
  %v85 = vpop.f32.mrb[0].mxu0
  %v86 = vadd.f32 %v30, %v85
  %v87 = vpop.f32.mrb[0].mxu0
  %88 = vdwg.mxu0
  %v89 = vld [vmem:[%s3] sm:$0xff]
  %v90 = vld [vmem:[%s3 + $0x8] sm:$0xff]
  %v91 = vadd.f32 %v89, %v83
  %v92 = vadd.f32 %v90, %v86
  %93 = vst.msk [vmem:[%s4] sm:$0xff] %vm44, %v91
  %94 = vst.msk [vmem:[%s4 + $0x8] sm:$0xff] %vm44, %v92
  // Predicated region
  $region18: #{transformer_encoder_forward.15} parent=0 // pred_check
    _
  $region19: #{transformer_encoder_forward.15} parent=0 // pred_check_branch
    %96 = sbr.rel (0) target = $region21
  $region20: #{transformer_encoder_forward.15} parent=0 // pred_region
    _
  $region21: #{transformer_encoder_forward.15} parent=0 // pred_fallthru
    _
  // Predicated region
  $region22: #{transformer_encoder_forward.15} parent=0 // pred_check
    _
  $region23: #{transformer_encoder_forward.15} parent=0 // pred_check_branch
    %98 = sbr.rel (0) target = $region25
  $region24: #{transformer_encoder_forward.15} parent=0 // pred_region
    _
  $region25: #{transformer_encoder_forward.15} parent=0 // pred_fallthru
    _

// kernel: transformer_encoder_forward.14
$region0: #{transformer_encoder_forward.14}
  #allocation0 [shape = 'u32[]', space=smem, size = 0x4, offset = 0x4, fixed_abs, tag = 'smem constant byte address 0x4 - core index']
  #allocation1 [shape = 'u32[144,128]{1,0:T(1,128)}', space=vmem, size = 0x12000, scoped, tag = 'internal scratch']
  %s0 = inlined_call_operand.vmem [shape: f32[2,8,32], index: 0, kind: input, shape index: {}]
  %s1 = inlined_call_operand.vmem [shape: f32[2,8,32], index: 1, kind: input, shape index: {}]
  %s2 = inlined_call_operand.vmem [shape: f32[2,8,32], index: 2, kind: input, shape index: {}]
  %s3 = inlined_call_operand.vmem [shape: f32[2,1,8], index: 3, kind: input, shape index: {}]
  %s4 = inlined_call_operand.vmem [shape: f32[2,8,32], index: 4, kind: output, shape index: {}]
  %s5 = sld [smem:[#allocation0]]
  $region49: #{transformer_encoder_forward.14} parent=0
    _
  %s7 = ssub.s32 1, %s5
  %s8 = scalar_select 0, %s7, %s5
  loop: start=0, step=1, limit=4
  $region2: #{transformer_encoder_forward.14} parent=0 // loop_pre_header
    _
  $region3: #{transformer_encoder_forward.14} parent=0 // loop_header
    %s10 = sphi 0, %s14
    %p11 = scmp.ge.s32.totalorder %s10, 4
    %s20 = sphi 0, %s22
    %s23 = sphi 0, %s20
    %s24 = sphi 0, %s23
    %s40 = sphi 0, %s24
    %s46 = sphi 0, %s48
    %s49 = sphi 0, %s46
    %s50 = sphi 0, %s49
    %s66 = sphi 0, %s50
    %s72 = sphi 0, %s74
    %s75 = sphi 0, %s72
    %s76 = sphi 0, %s75
    %s92 = sphi 0, %s76
    %s98 = sphi 0, %s100
    %s101 = sphi 0, %s98
    %s102 = sphi 0, %s101
    %s118 = sphi 0, %s102
    %s124 = sphi 0, %s126
    %s127 = sphi 0, %s124
    %s128 = sphi 0, %s127
    %s144 = sphi 0, %s128
  $region4: #{transformer_encoder_forward.14} parent=0 // loop_header_branch
    %13 = sbr.rel (%p11) target = $region8
  $region5: #{transformer_encoder_forward.14} parent=0 // loop_body
    %s15 = ssub.s32 %s10, 1
    %s16 = ssub.s32 %s10, 2
    %s17 = sadd.s32 %s10, 1
    %s18 = ssub.s32 %s10, %s17
    %p19 = scmp.eq.s32.totalorder %s18, 0
    %s21 = sadd.s32 %s20, 1
    %s22 = scalar_select %p19, %s20, %s21
    %p25 = pneg %p19
    %p26 = scmp.eq.s32.totalorder %s10, 1
    %p27 = por %p25, %p26
    %p28 = scmp.ne.s32.totalorder %s20, %s23
    %p29 = scmp.eq.s32.totalorder %s10, 0
    %p30 = por %p28, %p29
    %p31 = scmp.ne.s32.totalorder %s20, %s23
    %p32 = scmp.eq.s32.totalorder %s15, 1
    %p33 = por %p31, %p32
    %p34 = scmp.ne.s32.totalorder %s23, %s24
    %p35 = scmp.eq.s32.totalorder %s15, 0
    %p36 = por %p34, %p35
    %p37 = scmp.ne.s32.totalorder %s23, %s24
    %p38 = scmp.eq.s32.totalorder %s16, 1
    %p39 = por %p37, %p38
    %p41 = scmp.ne.s32.totalorder %s24, %s40
    %p42 = scmp.eq.s32.totalorder %s16, 0
    %p43 = por %p41, %p42
    %s44 = ssub.s32 %s10, %s17
    %p45 = scmp.eq.s32.totalorder %s44, 0
    %s47 = sadd.s32 %s46, 1
    %s48 = scalar_select %p45, %s46, %s47
    %p51 = pneg %p45
    %p52 = scmp.eq.s32.totalorder %s10, 1
    %p53 = por %p51, %p52
    %p54 = scmp.ne.s32.totalorder %s46, %s49
    %p55 = scmp.eq.s32.totalorder %s10, 0
    %p56 = por %p54, %p55
    %p57 = scmp.ne.s32.totalorder %s46, %s49
    %p58 = scmp.eq.s32.totalorder %s15, 1
    %p59 = por %p57, %p58
    %p60 = scmp.ne.s32.totalorder %s49, %s50
    %p61 = scmp.eq.s32.totalorder %s15, 0
    %p62 = por %p60, %p61
    %p63 = scmp.ne.s32.totalorder %s49, %s50
    %p64 = scmp.eq.s32.totalorder %s16, 1
    %p65 = por %p63, %p64
    %p67 = scmp.ne.s32.totalorder %s50, %s66
    %p68 = scmp.eq.s32.totalorder %s16, 0
    %p69 = por %p67, %p68
    %s70 = ssub.s32 %s10, %s17
    %p71 = scmp.eq.s32.totalorder %s70, 0
    %s73 = sadd.s32 %s72, 1
    %s74 = scalar_select %p71, %s72, %s73
    %p77 = pneg %p71
    %p78 = scmp.eq.s32.totalorder %s10, 1
    %p79 = por %p77, %p78
    %p80 = scmp.ne.s32.totalorder %s72, %s75
    %p81 = scmp.eq.s32.totalorder %s10, 0
    %p82 = por %p80, %p81
    %p83 = scmp.ne.s32.totalorder %s72, %s75
    %p84 = scmp.eq.s32.totalorder %s15, 1
    %p85 = por %p83, %p84
    %p86 = scmp.ne.s32.totalorder %s75, %s76
    %p87 = scmp.eq.s32.totalorder %s15, 0
    %p88 = por %p86, %p87
    %p89 = scmp.ne.s32.totalorder %s75, %s76
    %p90 = scmp.eq.s32.totalorder %s16, 1
    %p91 = por %p89, %p90
    %p93 = scmp.ne.s32.totalorder %s76, %s92
    %p94 = scmp.eq.s32.totalorder %s16, 0
    %p95 = por %p93, %p94
    %s96 = ssub.s32 %s10, %s17
    %p97 = scmp.eq.s32.totalorder %s96, 0
    %s99 = sadd.s32 %s98, 1
    %s100 = scalar_select %p97, %s98, %s99
    %p103 = pneg %p97
    %p104 = scmp.eq.s32.totalorder %s10, 1
    %p105 = por %p103, %p104
    %p106 = scmp.ne.s32.totalorder %s98, %s101
    %p107 = scmp.eq.s32.totalorder %s10, 0
    %p108 = por %p106, %p107
    %p109 = scmp.ne.s32.totalorder %s98, %s101
    %p110 = scmp.eq.s32.totalorder %s15, 1
    %p111 = por %p109, %p110
    %p112 = scmp.ne.s32.totalorder %s101, %s102
    %p113 = scmp.eq.s32.totalorder %s15, 0
    %p114 = por %p112, %p113
    %p115 = scmp.ne.s32.totalorder %s101, %s102
    %p116 = scmp.eq.s32.totalorder %s16, 1
    %p117 = por %p115, %p116
    %p119 = scmp.ne.s32.totalorder %s102, %s118
    %p120 = scmp.eq.s32.totalorder %s16, 0
    %p121 = por %p119, %p120
    %s122 = ssub.s32 %s10, %s17
    %p123 = scmp.eq.s32.totalorder %s122, 0
    %s125 = sadd.s32 %s124, 1
    %s126 = scalar_select %p123, %s124, %s125
    %p129 = pneg %p123
    %p130 = scmp.eq.s32.totalorder %s10, 1
    %p131 = por %p129, %p130
    %p132 = scmp.ne.s32.totalorder %s124, %s127
    %p133 = scmp.eq.s32.totalorder %s10, 0
    %p134 = por %p132, %p133
    %p135 = scmp.ne.s32.totalorder %s124, %s127
    %p136 = scmp.eq.s32.totalorder %s15, 1
    %p137 = por %p135, %p136
    %p138 = scmp.ne.s32.totalorder %s127, %s128
    %p139 = scmp.eq.s32.totalorder %s15, 0
    %p140 = por %p138, %p139
    %p141 = scmp.ne.s32.totalorder %s127, %s128
    %p142 = scmp.eq.s32.totalorder %s16, 1
    %p143 = por %p141, %p142
    %p145 = scmp.ne.s32.totalorder %s128, %s144
    %p146 = scmp.eq.s32.totalorder %s16, 0
    %p147 = por %p145, %p146
    %p148 = scmp.le.s32.totalorder 1, %s10
    %p149 = scmp.lt.s32.totalorder %s10, 3
    %p150 = pnand %p148, %p149
    %p151 = pneg %p150
    // Predicated region
    $region9: #{transformer_encoder_forward.14} parent=5 // pred_check
      _
    $region10: #{transformer_encoder_forward.14} parent=5 // pred_check_branch
      %153 = sbr.rel (%p150) target = $region12
    $region11: #{transformer_encoder_forward.14} parent=5 // pred_region
      %s154 = ssub.s32 %s10, 1
    $region12: #{transformer_encoder_forward.14} parent=5 // pred_fallthru
      _
    %p155 = scmp.lt.s32.totalorder %s10, 2
    // Predicated region
    $region13: #{transformer_encoder_forward.14} parent=5 // pred_check
      %p156 = pneg %p155
    $region14: #{transformer_encoder_forward.14} parent=5 // pred_check_branch
      %158 = sbr.rel (%p156) target = $region16
    $region15: #{transformer_encoder_forward.14} parent=5 // pred_region
      // Predicated region
      $region17: #{transformer_encoder_forward.14} parent=15 // pred_check
        %p159 = pneg %p30
      $region18: #{transformer_encoder_forward.14} parent=15 // pred_check_branch
        %161 = sbr.rel (%p159) target = $region20
      $region19: #{transformer_encoder_forward.14} parent=15 // pred_region
        %p162 = scmp.lt.s32.totalorder %s10, 1
        %s163 = scalar_select %p162, %s10, 1
        %s164 = smul.addr %s163, 8
        %s165 = scalar_lea.vmem %s0, %s164
      $region20: #{transformer_encoder_forward.14} parent=15 // pred_fallthru
        _
      // Predicated region
      $region21: #{transformer_encoder_forward.14} parent=15 // pred_check
        %p166 = pneg %p56
      $region22: #{transformer_encoder_forward.14} parent=15 // pred_check_branch
        %168 = sbr.rel (%p166) target = $region24
      $region23: #{transformer_encoder_forward.14} parent=15 // pred_region
        %p169 = scmp.lt.s32.totalorder %s10, 1
        %s170 = scalar_select %p169, %s10, 1
        %s171 = smul.addr %s170, 8
        %s172 = scalar_lea.vmem %s1, %s171
      $region24: #{transformer_encoder_forward.14} parent=15 // pred_fallthru
        _
      // Predicated region
      $region25: #{transformer_encoder_forward.14} parent=15 // pred_check
        %p173 = pneg %p82
      $region26: #{transformer_encoder_forward.14} parent=15 // pred_check_branch
        %175 = sbr.rel (%p173) target = $region28
      $region27: #{transformer_encoder_forward.14} parent=15 // pred_region
        %p176 = scmp.lt.s32.totalorder %s10, 1
        %s177 = scalar_select %p176, %s10, 1
        %s178 = smul.addr %s177, 8
        %s179 = scalar_lea.vmem %s2, %s178
      $region28: #{transformer_encoder_forward.14} parent=15 // pred_fallthru
        _
      // Predicated region
      $region29: #{transformer_encoder_forward.14} parent=15 // pred_check
        %p180 = pneg %p108
      $region30: #{transformer_encoder_forward.14} parent=15 // pred_check_branch
        %182 = sbr.rel (%p180) target = $region32
      $region31: #{transformer_encoder_forward.14} parent=15 // pred_region
        %p183 = scmp.lt.s32.totalorder %s10, 1
        %s184 = scalar_select %p183, %s10, 1
        %s185 = scalar_lea.vmem %s3, %s184
      $region32: #{transformer_encoder_forward.14} parent=15 // pred_fallthru
        _
    $region16: #{transformer_encoder_forward.14} parent=5 // pred_fallthru
      _
    %p186 = scmp.le.s32.totalorder 1, %s10
    %p187 = scmp.lt.s32.totalorder %s10, 3
    %p188 = pnand %p186, %p187
    %p189 = pneg %p188
    // Predicated region
    $region33: #{transformer_encoder_forward.14} parent=5 // pred_check
      _
    $region34: #{transformer_encoder_forward.14} parent=5 // pred_check_branch
      %191 = sbr.rel (%p188) target = $region36
    $region35: #{transformer_encoder_forward.14} parent=5 // pred_region
      %s192 = ssub.s32 %s10, 1
      %p193 = scmp.lt.s32.totalorder %s15, 1
      %s194 = scalar_select %p193, %s15, 1
      %s195 = smul.addr %s194, 8
      %s196 = scalar_lea.vmem %s0, %s195
      %p197 = pneg %p36
      %p198 = pneg %p33
      %p199 = scmp.lt.s32.totalorder %s15, 1
      %s200 = scalar_select %p199, %s15, 1
      %s201 = smul.addr %s200, 8
      %s202 = scalar_lea.vmem %s1, %s201
      %p203 = pneg %p62
      %p204 = pneg %p59
      %p205 = scmp.lt.s32.totalorder %s15, 1
      %s206 = scalar_select %p205, %s15, 1
      %s207 = smul.addr %s206, 8
      %s208 = scalar_lea.vmem %s2, %s207
      %p209 = pneg %p88
      %p210 = pneg %p85
      %p211 = scmp.lt.s32.totalorder %s15, 1
      %s212 = scalar_select %p211, %s15, 1
      %s213 = scalar_lea.vmem %s3, %s212
      %p214 = pneg %p114
      %p215 = pneg %p111
      %p216 = pneg %p140
      %p217 = pneg %p137
      %p218 = scmp.lt.s32.totalorder %s15, 1
      %s219 = scalar_select %p218, %s15, 1
      %s220 = smul.addr %s219, 8
      %s221 = scalar_lea.vmem %s4, %s220
      %p222 = scmp.lt.s32.totalorder %s15, 1
      %s223 = scalar_select %p222, %s15, 1
      %s224 = smul.addr %s223, 8
      %s225 = scalar_lea.vmem %s0, %s224
      %p226 = scmp.lt.s32.totalorder %s15, 1
      %s227 = scalar_select %p226, %s15, 1
      %s228 = smul.addr %s227, 8
      %s229 = scalar_lea.vmem %s1, %s228
      %p230 = scmp.lt.s32.totalorder %s15, 1
      %s231 = scalar_select %p230, %s15, 1
      %s232 = smul.addr %s231, 8
      %s233 = scalar_lea.vmem %s2, %s232
      %p234 = scmp.lt.s32.totalorder %s15, 1
      %s235 = scalar_select %p234, %s15, 1
      %s236 = scalar_lea.vmem %s3, %s235
      %p237 = scmp.lt.s32.totalorder %s15, 1
      %s238 = scalar_select %p237, %s15, 1
      %s239 = smul.addr %s238, 8
      %s240 = scalar_lea.vmem %s4, %s239
      %v242 = vld [vmem:[%s225] sm:$0xff]
      %v243 = vld [vmem:[%s229] sm:$0xff]
      %v244 = vld [vmem:[%s233] sm:$0xff]
      %v245 = vld [vmem:[%s236] sm:$0x1]
      %v246 = vpack.c.bf16 %v242, %v242
      %v247 = vpack.c.bf16 %v243, %v243
      %v248 = vpack.c.bf16 %v244, %v244
      %vm249 = vcmask 64512
      %v251 = vsel %vm249, %v246, 0
      %v254 = vsel %vm249, %v247, 0
      %256 = vmatprep.subr.bf16.mxu0 0
      %257 = vmatpush1.bf16.xpose.msra.mxu0 %v254
      %258 = vmatprep.subr.bf16.mxu0 0
      %259 = vmatpush1.bf16.xpose.msra.mxu0 0
      %260 = vmatprep.subr.bf16.mxu0 0
      %261 = vmatpush1.bf16.xpose.msra.mxu0 0
      %262 = vmatprep.subr.bf16.mxu0 0
      %263 = vmatpush1.bf16.xpose.msra.mxu0 0
      %264 = vmatprep.subr.bf16.mxu0 0
      %265 = vmatpush1.bf16.xpose.msra.mxu0 0
      %266 = vmatprep.subr.bf16.mxu0 0
      %267 = vmatpush1.bf16.xpose.msra.mxu0 0
      %268 = vmatprep.subr.bf16.mxu0 0
      %269 = vmatpush1.bf16.xpose.msra.mxu0 0
      %270 = vmatprep.subr.bf16.mxu0 0
      %271 = vmatpush1.bf16.xpose.msra.mxu0 0
      %272 = vmatprep.subr.bf16.mxu0 0
      %273 = vmatpush1.bf16.xpose.msra.mxu0 0
      %274 = vmatprep.subr.bf16.mxu0 0
      %275 = vmatpush1.bf16.xpose.msra.mxu0 0
      %276 = vmatprep.subr.bf16.mxu0 0
      %277 = vmatpush1.bf16.xpose.msra.mxu0 0
      %278 = vmatprep.subr.bf16.mxu0 0
      %279 = vmatpush1.bf16.xpose.msra.mxu0 0
      %280 = vmatprep.subr.bf16.mxu0 0
      %281 = vmatpush1.bf16.xpose.msra.mxu0 0
      %282 = vmatprep.subr.bf16.mxu0 0
      %283 = vmatpush1.bf16.xpose.msra.mxu0 0
      %284 = vmatprep.subr.bf16.mxu0 0
      %285 = vmatpush1.bf16.xpose.msra.mxu0 0
      %286 = vmatprep.subr.bf16.mxu0 0
      %287 = vmatpush1.bf16.xpose.msra.mxu0 0
      %288 = vmatprep.mubr.bf16.mxu0 0
      %289 = vmatmul.mubr.bf16.gmra.mrb[0].mxu0 %v251
      %v290 = vpop.f32.mrb[0].mxu0
      %v291 = vadd.f32 0.0, %v290
      %v292 = vpop.f32.mrb[0].mxu0
      %v293 = vpop.f32.mrb[0].mxu0
      %v294 = vpop.f32.mrb[0].mxu0
      %295 = vdwg.mxu0
      %v296 = vmul.f32 %v291, 0.35355338
      %vm297 = vcmp.gt.f32.partialorder %v245, 0.0
      %v298 = vsel %vm297, 1, 0
      %v299 = vlaneseq
      %v300 = vshrl.u32 %v299, 7
      %v301 = vsub.s32 0, %v300
      %v302 = vrot.slane %v298, %v301
      %vm303 = vcmp.eq.s32.totalorder %v302, 1
      %v304 = vsel %vm303, %v296, -3.4028235e+38
      %v305 = vsel %vm249, %v304, -inf
      %306 = vmax.xlane.f32.xlu0 %v305
      %v307 = vpop.xlane.xlu0 %306
      %v308 = vsub.f32 %v304, %v307
      %v309 = vmul.f32 %v308, 1.442695
      %v310 = vpow.pop %v309
      %v311 = vsel %vm249, %v310, 0.0
      %312 = vadd.xlane.f32.xlu0 %v311
      %v313 = vpop.xlane.xlu0 %312
      %v314 = vrcp.pop %v313
      %v315 = vmul.f32 %v310, %v314
      %v316 = vsel %vm303, %v315, 0.0
      %v317 = vpack.c.bf16 %v316, %v316
      %v319 = vsel %vm249, %v317, 0
      %vm321 = vcmask 1043456
      %v323 = vsel %vm321, %v248, 0
      %325 = vmatprep.subr.bf16.mxu0 0
      %326 = vmatpush1.bf16.msra.mxu0 %v323
      %327 = vmatprep.subr.bf16.mxu0 0
      %328 = vmatpush1.bf16.msra.mxu0 0
      %329 = vmatprep.subr.bf16.mxu0 0
      %330 = vmatpush1.bf16.msra.mxu0 0
      %331 = vmatprep.subr.bf16.mxu0 0
      %332 = vmatpush1.bf16.msra.mxu0 0
      %333 = vmatprep.subr.bf16.mxu0 0
      %334 = vmatpush1.bf16.msra.mxu0 0
      %335 = vmatprep.subr.bf16.mxu0 0
      %336 = vmatpush1.bf16.msra.mxu0 0
      %337 = vmatprep.subr.bf16.mxu0 0
      %338 = vmatpush1.bf16.msra.mxu0 0
      %339 = vmatprep.subr.bf16.mxu0 0
      %340 = vmatpush1.bf16.msra.mxu0 0
      %341 = vmatprep.subr.bf16.mxu0 0
      %342 = vmatpush1.bf16.msra.mxu0 0
      %343 = vmatprep.subr.bf16.mxu0 0
      %344 = vmatpush1.bf16.msra.mxu0 0
      %345 = vmatprep.subr.bf16.mxu0 0
      %346 = vmatpush1.bf16.msra.mxu0 0
      %347 = vmatprep.subr.bf16.mxu0 0
      %348 = vmatpush1.bf16.msra.mxu0 0
      %349 = vmatprep.subr.bf16.mxu0 0
      %350 = vmatpush1.bf16.msra.mxu0 0
      %351 = vmatprep.subr.bf16.mxu0 0
      %352 = vmatpush1.bf16.msra.mxu0 0
      %353 = vmatprep.subr.bf16.mxu0 0
      %354 = vmatpush1.bf16.msra.mxu0 0
      %355 = vmatprep.subr.bf16.mxu0 0
      %356 = vmatpush1.bf16.msra.mxu0 0
      %357 = vmatprep.mubr.bf16.mxu0 0
      %358 = vmatmul.mubr.bf16.gmra.mrb[0].mxu0 %v319
      %v359 = vpop.f32.mrb[0].mxu0
      %v360 = vadd.f32 0.0, %v359
      %v361 = vpop.f32.mrb[0].mxu0
      %v362 = vpop.f32.mrb[0].mxu0
      %v363 = vpop.f32.mrb[0].mxu0
      %364 = vdwg.mxu0
      %366 = vrot.lane.b32.xlu0 %v246, 120
      %v367 = vpop.permute.xlu0 %366
      %369 = vrot.lane.b32.xlu0 %v247, 120
      %v370 = vpop.permute.xlu0 %369
      %v372 = vsel %vm249, %v367, 0
      %v375 = vsel %vm249, %v370, 0
      %377 = vmatprep.subr.bf16.mxu0 0
      %378 = vmatpush1.bf16.xpose.msra.mxu0 %v375
      %379 = vmatprep.subr.bf16.mxu0 0
      %380 = vmatpush1.bf16.xpose.msra.mxu0 0
      %381 = vmatprep.subr.bf16.mxu0 0
      %382 = vmatpush1.bf16.xpose.msra.mxu0 0
      %383 = vmatprep.subr.bf16.mxu0 0
      %384 = vmatpush1.bf16.xpose.msra.mxu0 0
      %385 = vmatprep.subr.bf16.mxu0 0
      %386 = vmatpush1.bf16.xpose.msra.mxu0 0
      %387 = vmatprep.subr.bf16.mxu0 0
      %388 = vmatpush1.bf16.xpose.msra.mxu0 0
      %389 = vmatprep.subr.bf16.mxu0 0
      %390 = vmatpush1.bf16.xpose.msra.mxu0 0
      %391 = vmatprep.subr.bf16.mxu0 0
      %392 = vmatpush1.bf16.xpose.msra.mxu0 0
      %393 = vmatprep.subr.bf16.mxu0 0
      %394 = vmatpush1.bf16.xpose.msra.mxu0 0
      %395 = vmatprep.subr.bf16.mxu0 0
      %396 = vmatpush1.bf16.xpose.msra.mxu0 0
      %397 = vmatprep.subr.bf16.mxu0 0
      %398 = vmatpush1.bf16.xpose.msra.mxu0 0
      %399 = vmatprep.subr.bf16.mxu0 0
      %400 = vmatpush1.bf16.xpose.msra.mxu0 0
      %401 = vmatprep.subr.bf16.mxu0 0
      %402 = vmatpush1.bf16.xpose.msra.mxu0 0
      %403 = vmatprep.subr.bf16.mxu0 0
      %404 = vmatpush1.bf16.xpose.msra.mxu0 0
      %405 = vmatprep.subr.bf16.mxu0 0
      %406 = vmatpush1.bf16.xpose.msra.mxu0 0
      %407 = vmatprep.subr.bf16.mxu0 0
      %408 = vmatpush1.bf16.xpose.msra.mxu0 0
      %409 = vmatprep.mubr.bf16.mxu0 0
      %410 = vmatmul.mubr.bf16.gmra.mrb[0].mxu0 %v372
      %v411 = vpop.f32.mrb[0].mxu0
      %v412 = vadd.f32 0.0, %v411
      %v413 = vpop.f32.mrb[0].mxu0
      %v414 = vpop.f32.mrb[0].mxu0
      %v415 = vpop.f32.mrb[0].mxu0
      %416 = vdwg.mxu0
      %v417 = vmul.f32 %v412, 0.35355338
      %v418 = vsel %vm303, %v417, -3.4028235e+38
      %v419 = vsel %vm249, %v418, -inf
      %420 = vmax.xlane.f32.xlu0 %v419
      %v421 = vpop.xlane.xlu0 %420
      %v422 = vsub.f32 %v418, %v421
      %v423 = vmul.f32 %v422, 1.442695
      %v424 = vpow.pop %v423
      %v425 = vsel %vm249, %v424, 0.0
      %426 = vadd.xlane.f32.xlu0 %v425
      %v427 = vpop.xlane.xlu0 %426
      %v428 = vrcp.pop %v427
      %v429 = vmul.f32 %v424, %v428
      %v430 = vsel %vm303, %v429, 0.0
      %v431 = vpack.c.bf16 %v430, %v430
      %433 = vrot.lane.b32.xlu0 %v248, 120
      %v434 = vpop.permute.xlu0 %433
      %v436 = vsel %vm249, %v431, 0
      %v439 = vsel %vm321, %v434, 0
      %441 = vmatprep.subr.bf16.mxu0 0
      %442 = vmatpush1.bf16.msra.mxu0 %v439
      %443 = vmatprep.subr.bf16.mxu0 0
      %444 = vmatpush1.bf16.msra.mxu0 0
      %445 = vmatprep.subr.bf16.mxu0 0
      %446 = vmatpush1.bf16.msra.mxu0 0
      %447 = vmatprep.subr.bf16.mxu0 0
      %448 = vmatpush1.bf16.msra.mxu0 0
      %449 = vmatprep.subr.bf16.mxu0 0
      %450 = vmatpush1.bf16.msra.mxu0 0
      %451 = vmatprep.subr.bf16.mxu0 0
      %452 = vmatpush1.bf16.msra.mxu0 0
      %453 = vmatprep.subr.bf16.mxu0 0
      %454 = vmatpush1.bf16.msra.mxu0 0
      %455 = vmatprep.subr.bf16.mxu0 0
      %456 = vmatpush1.bf16.msra.mxu0 0
      %457 = vmatprep.subr.bf16.mxu0 0
      %458 = vmatpush1.bf16.msra.mxu0 0
      %459 = vmatprep.subr.bf16.mxu0 0
      %460 = vmatpush1.bf16.msra.mxu0 0
      %461 = vmatprep.subr.bf16.mxu0 0
      %462 = vmatpush1.bf16.msra.mxu0 0
      %463 = vmatprep.subr.bf16.mxu0 0
      %464 = vmatpush1.bf16.msra.mxu0 0
      %465 = vmatprep.subr.bf16.mxu0 0
      %466 = vmatpush1.bf16.msra.mxu0 0
      %467 = vmatprep.subr.bf16.mxu0 0
      %468 = vmatpush1.bf16.msra.mxu0 0
      %469 = vmatprep.subr.bf16.mxu0 0
      %470 = vmatpush1.bf16.msra.mxu0 0
      %471 = vmatprep.subr.bf16.mxu0 0
      %472 = vmatpush1.bf16.msra.mxu0 0
      %473 = vmatprep.mubr.bf16.mxu0 0
      %474 = vmatmul.mubr.bf16.gmra.mrb[0].mxu0 %v436
      %v475 = vpop.f32.mrb[0].mxu0
      %v476 = vadd.f32 0.0, %v475
      %v477 = vpop.f32.mrb[0].mxu0
      %v478 = vpop.f32.mrb[0].mxu0
      %v479 = vpop.f32.mrb[0].mxu0
      %480 = vdwg.mxu0
      %481 = vrot.lane.b32.xlu0 %v246, 112
      %v482 = vpop.permute.xlu0 %481
      %483 = vrot.lane.b32.xlu0 %v247, 112
      %v484 = vpop.permute.xlu0 %483
      %v486 = vsel %vm249, %v482, 0
      %v489 = vsel %vm249, %v484, 0
      %491 = vmatprep.subr.bf16.mxu0 0
      %492 = vmatpush1.bf16.xpose.msra.mxu0 %v489
      %493 = vmatprep.subr.bf16.mxu0 0
      %494 = vmatpush1.bf16.xpose.msra.mxu0 0
      %495 = vmatprep.subr.bf16.mxu0 0
      %496 = vmatpush1.bf16.xpose.msra.mxu0 0
      %497 = vmatprep.subr.bf16.mxu0 0
      %498 = vmatpush1.bf16.xpose.msra.mxu0 0
      %499 = vmatprep.subr.bf16.mxu0 0
      %500 = vmatpush1.bf16.xpose.msra.mxu0 0
      %501 = vmatprep.subr.bf16.mxu0 0
      %502 = vmatpush1.bf16.xpose.msra.mxu0 0
      %503 = vmatprep.subr.bf16.mxu0 0
      %504 = vmatpush1.bf16.xpose.msra.mxu0 0
      %505 = vmatprep.subr.bf16.mxu0 0
      %506 = vmatpush1.bf16.xpose.msra.mxu0 0
      %507 = vmatprep.subr.bf16.mxu0 0
      %508 = vmatpush1.bf16.xpose.msra.mxu0 0
      %509 = vmatprep.subr.bf16.mxu0 0
      %510 = vmatpush1.bf16.xpose.msra.mxu0 0
      %511 = vmatprep.subr.bf16.mxu0 0
      %512 = vmatpush1.bf16.xpose.msra.mxu0 0
      %513 = vmatprep.subr.bf16.mxu0 0
      %514 = vmatpush1.bf16.xpose.msra.mxu0 0
      %515 = vmatprep.subr.bf16.mxu0 0
      %516 = vmatpush1.bf16.xpose.msra.mxu0 0
      %517 = vmatprep.subr.bf16.mxu0 0
      %518 = vmatpush1.bf16.xpose.msra.mxu0 0
      %519 = vmatprep.subr.bf16.mxu0 0
      %520 = vmatpush1.bf16.xpose.msra.mxu0 0
      %521 = vmatprep.subr.bf16.mxu0 0
      %522 = vmatpush1.bf16.xpose.msra.mxu0 0
      %523 = vmatprep.mubr.bf16.mxu0 0
      %524 = vmatmul.mubr.bf16.gmra.mrb[0].mxu0 %v486
      %v525 = vpop.f32.mrb[0].mxu0
      %v526 = vadd.f32 0.0, %v525
      %v527 = vpop.f32.mrb[0].mxu0
      %v528 = vpop.f32.mrb[0].mxu0
      %v529 = vpop.f32.mrb[0].mxu0
      %530 = vdwg.mxu0
      %v531 = vmul.f32 %v526, 0.35355338
      %v532 = vsel %vm303, %v531, -3.4028235e+38
      %v533 = vsel %vm249, %v532, -inf
      %534 = vmax.xlane.f32.xlu0 %v533
      %v535 = vpop.xlane.xlu0 %534
      %v536 = vsub.f32 %v532, %v535
      %v537 = vmul.f32 %v536, 1.442695
      %v538 = vpow.pop %v537
      %v539 = vsel %vm249, %v538, 0.0
      %540 = vadd.xlane.f32.xlu0 %v539
      %v541 = vpop.xlane.xlu0 %540
      %v542 = vrcp.pop %v541
      %v543 = vmul.f32 %v538, %v542
      %v544 = vsel %vm303, %v543, 0.0
      %v545 = vpack.c.bf16 %v544, %v544
      %546 = vrot.lane.b32.xlu0 %v248, 112
      %v547 = vpop.permute.xlu0 %546
      %v549 = vsel %vm249, %v545, 0
      %v552 = vsel %vm321, %v547, 0
      %554 = vmatprep.subr.bf16.mxu0 0
      %555 = vmatpush1.bf16.msra.mxu0 %v552
      %556 = vmatprep.subr.bf16.mxu0 0
      %557 = vmatpush1.bf16.msra.mxu0 0
      %558 = vmatprep.subr.bf16.mxu0 0
      %559 = vmatpush1.bf16.msra.mxu0 0
      %560 = vmatprep.subr.bf16.mxu0 0
      %561 = vmatpush1.bf16.msra.mxu0 0
      %562 = vmatprep.subr.bf16.mxu0 0
      %563 = vmatpush1.bf16.msra.mxu0 0
      %564 = vmatprep.subr.bf16.mxu0 0
      %565 = vmatpush1.bf16.msra.mxu0 0
      %566 = vmatprep.subr.bf16.mxu0 0
      %567 = vmatpush1.bf16.msra.mxu0 0
      %568 = vmatprep.subr.bf16.mxu0 0
      %569 = vmatpush1.bf16.msra.mxu0 0
      %570 = vmatprep.subr.bf16.mxu0 0
      %571 = vmatpush1.bf16.msra.mxu0 0
      %572 = vmatprep.subr.bf16.mxu0 0
      %573 = vmatpush1.bf16.msra.mxu0 0
      %574 = vmatprep.subr.bf16.mxu0 0
      %575 = vmatpush1.bf16.msra.mxu0 0
      %576 = vmatprep.subr.bf16.mxu0 0
      %577 = vmatpush1.bf16.msra.mxu0 0
      %578 = vmatprep.subr.bf16.mxu0 0
      %579 = vmatpush1.bf16.msra.mxu0 0
      %580 = vmatprep.subr.bf16.mxu0 0
      %581 = vmatpush1.bf16.msra.mxu0 0
      %582 = vmatprep.subr.bf16.mxu0 0
      %583 = vmatpush1.bf16.msra.mxu0 0
      %584 = vmatprep.subr.bf16.mxu0 0
      %585 = vmatpush1.bf16.msra.mxu0 0
      %586 = vmatprep.mubr.bf16.mxu0 0
      %587 = vmatmul.mubr.bf16.gmra.mrb[0].mxu0 %v549
      %v588 = vpop.f32.mrb[0].mxu0
      %v589 = vadd.f32 0.0, %v588
      %v590 = vpop.f32.mrb[0].mxu0
      %v591 = vpop.f32.mrb[0].mxu0
      %v592 = vpop.f32.mrb[0].mxu0
      %593 = vdwg.mxu0
      %594 = vrot.lane.b32.xlu0 %v246, 104
      %v595 = vpop.permute.xlu0 %594
      %596 = vrot.lane.b32.xlu0 %v247, 104
      %v597 = vpop.permute.xlu0 %596
      %v599 = vsel %vm249, %v595, 0
      %v602 = vsel %vm249, %v597, 0
      %604 = vmatprep.subr.bf16.mxu0 0
      %605 = vmatpush1.bf16.xpose.msra.mxu0 %v602
      %606 = vmatprep.subr.bf16.mxu0 0
      %607 = vmatpush1.bf16.xpose.msra.mxu0 0
      %608 = vmatprep.subr.bf16.mxu0 0
      %609 = vmatpush1.bf16.xpose.msra.mxu0 0
      %610 = vmatprep.subr.bf16.mxu0 0
      %611 = vmatpush1.bf16.xpose.msra.mxu0 0
      %612 = vmatprep.subr.bf16.mxu0 0
      %613 = vmatpush1.bf16.xpose.msra.mxu0 0
      %614 = vmatprep.subr.bf16.mxu0 0
      %615 = vmatpush1.bf16.xpose.msra.mxu0 0
      %616 = vmatprep.subr.bf16.mxu0 0
      %617 = vmatpush1.bf16.xpose.msra.mxu0 0
      %618 = vmatprep.subr.bf16.mxu0 0
      %619 = vmatpush1.bf16.xpose.msra.mxu0 0
      %620 = vmatprep.subr.bf16.mxu0 0
      %621 = vmatpush1.bf16.xpose.msra.mxu0 0
      %622 = vmatprep.subr.bf16.mxu0 0
      %623 = vmatpush1.bf16.xpose.msra.mxu0 0
      %624 = vmatprep.subr.bf16.mxu0 0
      %625 = vmatpush1.bf16.xpose.msra.mxu0 0
      %626 = vmatprep.subr.bf16.mxu0 0
      %627 = vmatpush1.bf16.xpose.msra.mxu0 0
      %628 = vmatprep.subr.bf16.mxu0 0
      %629 = vmatpush1.bf16.xpose.msra.mxu0 0
      %630 = vmatprep.subr.bf16.mxu0 0
      %631 = vmatpush1.bf16.xpose.msra.mxu0 0
      %632 = vmatprep.subr.bf16.mxu0 0
      %633 = vmatpush1.bf16.xpose.msra.mxu0 0
      %634 = vmatprep.subr.bf16.mxu0 0
      %635 = vmatpush1.bf16.xpose.msra.mxu0 0
      %636 = vmatprep.mubr.bf16.mxu0 0
      %637 = vmatmul.mubr.bf16.gmra.mrb[0].mxu0 %v599
      %v638 = vpop.f32.mrb[0].mxu0
      %v639 = vadd.f32 0.0, %v638
      %v640 = vpop.f32.mrb[0].mxu0
      %v641 = vpop.f32.mrb[0].mxu0
      %v642 = vpop.f32.mrb[0].mxu0
      %643 = vdwg.mxu0
      %v644 = vmul.f32 %v639, 0.35355338
      %v645 = vsel %vm303, %v644, -3.4028235e+38
      %v646 = vsel %vm249, %v645, -inf
      %647 = vmax.xlane.f32.xlu0 %v646
      %v648 = vpop.xlane.xlu0 %647
      %v649 = vsub.f32 %v645, %v648
      %v650 = vmul.f32 %v649, 1.442695
      %v651 = vpow.pop %v650
      %v652 = vsel %vm249, %v651, 0.0
      %653 = vadd.xlane.f32.xlu0 %v652
      %v654 = vpop.xlane.xlu0 %653
      %v655 = vrcp.pop %v654
      %v656 = vmul.f32 %v651, %v655
      %v657 = vsel %vm303, %v656, 0.0
      %v658 = vpack.c.bf16 %v657, %v657
      %659 = vrot.lane.b32.xlu0 %v248, 104
      %v660 = vpop.permute.xlu0 %659
      %v662 = vsel %vm249, %v658, 0
      %v665 = vsel %vm321, %v660, 0
      %667 = vmatprep.subr.bf16.mxu0 0
      %668 = vmatpush1.bf16.msra.mxu0 %v665
      %669 = vmatprep.subr.bf16.mxu0 0
      %670 = vmatpush1.bf16.msra.mxu0 0
      %671 = vmatprep.subr.bf16.mxu0 0
      %672 = vmatpush1.bf16.msra.mxu0 0
      %673 = vmatprep.subr.bf16.mxu0 0
      %674 = vmatpush1.bf16.msra.mxu0 0
      %675 = vmatprep.subr.bf16.mxu0 0
      %676 = vmatpush1.bf16.msra.mxu0 0
      %677 = vmatprep.subr.bf16.mxu0 0
      %678 = vmatpush1.bf16.msra.mxu0 0
      %679 = vmatprep.subr.bf16.mxu0 0
      %680 = vmatpush1.bf16.msra.mxu0 0
      %681 = vmatprep.subr.bf16.mxu0 0
      %682 = vmatpush1.bf16.msra.mxu0 0
      %683 = vmatprep.subr.bf16.mxu0 0
      %684 = vmatpush1.bf16.msra.mxu0 0
      %685 = vmatprep.subr.bf16.mxu0 0
      %686 = vmatpush1.bf16.msra.mxu0 0
      %687 = vmatprep.subr.bf16.mxu0 0
      %688 = vmatpush1.bf16.msra.mxu0 0
      %689 = vmatprep.subr.bf16.mxu0 0
      %690 = vmatpush1.bf16.msra.mxu0 0
      %691 = vmatprep.subr.bf16.mxu0 0
      %692 = vmatpush1.bf16.msra.mxu0 0
      %693 = vmatprep.subr.bf16.mxu0 0
      %694 = vmatpush1.bf16.msra.mxu0 0
      %695 = vmatprep.subr.bf16.mxu0 0
      %696 = vmatpush1.bf16.msra.mxu0 0
      %697 = vmatprep.subr.bf16.mxu0 0
      %698 = vmatpush1.bf16.msra.mxu0 0
      %699 = vmatprep.mubr.bf16.mxu0 0
      %700 = vmatmul.mubr.bf16.gmra.mrb[0].mxu0 %v662
      %v701 = vpop.f32.mrb[0].mxu0
      %v702 = vadd.f32 0.0, %v701
      %v703 = vpop.f32.mrb[0].mxu0
      %v704 = vpop.f32.mrb[0].mxu0
      %v705 = vpop.f32.mrb[0].mxu0
      %706 = vdwg.mxu0
      %708 = vrot.lane.b32.xlu0 %v476, 8
      %v709 = vpop.permute.xlu0 %708
      %712 = vrot.lane.b32.xlu0 %v589, 16
      %v713 = vpop.permute.xlu0 %712
      %716 = vrot.lane.b32.xlu0 %v702, 24
      %v717 = vpop.permute.xlu0 %716
      %v719 = vsel %vm249, %v360, %v709
      %vm720 = vcmask 130048
      %v721 = vsel %vm720, %v719, %v713
      %vm722 = vcmask 195584
      %v723 = vsel %vm722, %v721, %v717
      %vm724 = vcmask 261120
      %725 = vst.msk [vmem:[%s240] sm:$0xff] %vm724, %v723
      %p726 = scmp.lt.s32.totalorder %s15, 1
      %s727 = scalar_select %p726, %s15, 1
      %s728 = smul.addr %s727, 8
      %s729 = scalar_lea.vmem %s4, %s728
      // Predicated region
      $region37: #{transformer_encoder_forward.14} parent=35 // pred_check
        %p730 = pneg %p137
      $region38: #{transformer_encoder_forward.14} parent=35 // pred_check_branch
        %732 = sbr.rel (%p730) target = $region40
      $region39: #{transformer_encoder_forward.14} parent=35 // pred_region
        _
      $region40: #{transformer_encoder_forward.14} parent=35 // pred_fallthru
        _
    $region36: #{transformer_encoder_forward.14} parent=5 // pred_fallthru
      _
    %p733 = scmp.le.s32.totalorder 2, %s10
    // Predicated region
    $region41: #{transformer_encoder_forward.14} parent=5 // pred_check
      %p734 = pneg %p733
    $region42: #{transformer_encoder_forward.14} parent=5 // pred_check_branch
      %736 = sbr.rel (%p734) target = $region44
    $region43: #{transformer_encoder_forward.14} parent=5 // pred_region
      %s737 = ssub.s32 %s10, 2
      // Predicated region
      $region45: #{transformer_encoder_forward.14} parent=43 // pred_check
        %p738 = pneg %p143
      $region46: #{transformer_encoder_forward.14} parent=43 // pred_check_branch
        %740 = sbr.rel (%p738) target = $region48
      $region47: #{transformer_encoder_forward.14} parent=43 // pred_region
        %p741 = scmp.lt.s32.totalorder %s16, 1
        %s742 = scalar_select %p741, %s16, 1
        %s743 = smul.addr %s742, 8
        %s744 = scalar_lea.vmem %s4, %s743
      $region48: #{transformer_encoder_forward.14} parent=43 // pred_fallthru
        _
    $region44: #{transformer_encoder_forward.14} parent=5 // pred_fallthru
      _
  $region6: #{transformer_encoder_forward.14} parent=0 // loop_footer
    %s14 = sadd.s32 1, %s10
  $region7: #{transformer_encoder_forward.14} parent=0 // loop_footer_branch
    %9 = sbr.rel target = $region3
  $region8: #{transformer_encoder_forward.14} parent=0 // loop_exit
    _

// kernel: transformer_encoder_forward.16
$region0: #{transformer_encoder_forward.16}
  #allocation0 [shape = 'u32[]', space=smem, size = 0x4, offset = 0x4, fixed_abs, tag = 'smem constant byte address 0x4 - core index']
  #allocation1 [shape = 'u32[144,128]{1,0:T(1,128)}', space=vmem, size = 0x12000, scoped, tag = 'internal scratch']
  %s0 = inlined_call_operand.vmem [shape: f32[16,32], index: 0, kind: input, shape index: {}]
  %s1 = inlined_call_operand.vmem [shape: f32[1,32], index: 1, kind: input, shape index: {}]
  %s2 = inlined_call_operand.vmem [shape: f32[1,32], index: 2, kind: input, shape index: {}]
  %s3 = inlined_call_operand.vmem [shape: bf16[32,64], index: 3, kind: input, shape index: {}]
  %s4 = inlined_call_operand.vmem [shape: f32[1,64], index: 4, kind: input, shape index: {}]
  %s5 = inlined_call_operand.vmem [shape: f32[16,64], index: 5, kind: output, shape index: {}]
  %s6 = sld [smem:[#allocation0]]
  $region30: #{transformer_encoder_forward.16} parent=0
    _
  %s8 = ssub.s32 1, %s6
  %s9 = scalar_select 0, %s8, %s6
  // Predicated region
  $region2: #{transformer_encoder_forward.16} parent=0 // pred_check
    _
  $region3: #{transformer_encoder_forward.16} parent=0 // pred_check_branch
    %11 = sbr.rel (0) target = $region5
  $region4: #{transformer_encoder_forward.16} parent=0 // pred_region
    _
  $region5: #{transformer_encoder_forward.16} parent=0 // pred_fallthru
    _
  // Predicated region
  $region6: #{transformer_encoder_forward.16} parent=0 // pred_check
    _
  $region7: #{transformer_encoder_forward.16} parent=0 // pred_check_branch
    %13 = sbr.rel (0) target = $region9
  $region8: #{transformer_encoder_forward.16} parent=0 // pred_region
    _
  $region9: #{transformer_encoder_forward.16} parent=0 // pred_fallthru
    _
  // Predicated region
  $region10: #{transformer_encoder_forward.16} parent=0 // pred_check
    _
  $region11: #{transformer_encoder_forward.16} parent=0 // pred_check_branch
    %15 = sbr.rel (0) target = $region13
  $region12: #{transformer_encoder_forward.16} parent=0 // pred_region
    _
  $region13: #{transformer_encoder_forward.16} parent=0 // pred_fallthru
    _
  // Predicated region
  $region14: #{transformer_encoder_forward.16} parent=0 // pred_check
    _
  $region15: #{transformer_encoder_forward.16} parent=0 // pred_check_branch
    %17 = sbr.rel (0) target = $region17
  $region16: #{transformer_encoder_forward.16} parent=0 // pred_region
    _
  $region17: #{transformer_encoder_forward.16} parent=0 // pred_fallthru
    _
  // Predicated region
  $region18: #{transformer_encoder_forward.16} parent=0 // pred_check
    _
  $region19: #{transformer_encoder_forward.16} parent=0 // pred_check_branch
    %19 = sbr.rel (0) target = $region21
  $region20: #{transformer_encoder_forward.16} parent=0 // pred_region
    _
  $region21: #{transformer_encoder_forward.16} parent=0 // pred_fallthru
    _
  %v21 = vld [vmem:[%s0] sm:$0xff]
  %v22 = vld [vmem:[%s0 + $0x8] sm:$0xff]
  %vm23 = vcmask 261120
  %v24 = vsel %vm23, %v21, 0.0
  %25 = vadd.xlane.f32.xlu0 %v24
  %v26 = vpop.xlane.xlu0 %25
  %v27 = vsel %vm23, %v22, 0.0
  %28 = vadd.xlane.f32.xlu0 %v27
  %v29 = vpop.xlane.xlu0 %28
  %v30 = vrcp.pop 32.0
  %v31 = vmul.f32 %v26, %v30
  %v32 = vmul.f32 %v29, %v30
  %v33 = vsub.f32 %v21, %v31
  %v34 = vsub.f32 %v22, %v32
  %v35 = vmul.f32 %v33, %v33
  %v36 = vmul.f32 %v34, %v34
  %v37 = vsel %vm23, %v35, 0.0
  %38 = vadd.xlane.f32.xlu0 %v37
  %v39 = vpop.xlane.xlu0 %38
  %v40 = vsel %vm23, %v36, 0.0
  %41 = vadd.xlane.f32.xlu0 %v40
  %v42 = vpop.xlane.xlu0 %41
  %v43 = vmul.f32 %v39, %v30
  %v44 = vmul.f32 %v42, %v30
  %v45 = vadd.f32 %v43, 1e-12
  %v46 = vadd.f32 %v44, 1e-12
  %v47 = vrsqrt.pop %v45
  %v48 = vrsqrt.pop %v46
  %v49 = vmul.f32 %v33, %v47
  %v50 = vmul.f32 %v34, %v48
  %v51 = vld [vmem:[%s1] sm:$0x1]
  %v53 = vlaneseq
  %v54 = vshrl.u32 %v53, 7
  %v55 = vsub.s32 0, %v54
  %v56 = vrot.slane %v51, %v55
  %v58 = vmul.f32 %v49, %v56
  %v59 = vmul.f32 %v50, %v56
  %v60 = vld [vmem:[%s2] sm:$0x1]
  %v62 = vlaneseq
  %v63 = vshrl.u32 %v62, 7
  %v64 = vsub.s32 0, %v63
  %v65 = vrot.slane %v60, %v64
  %v67 = vadd.f32 %v58, %v65
  %v68 = vadd.f32 %v59, %v65
  %v69 = vpack.c.bf16 %v68, %v67
  %v70 = vld [vmem:[%s3] sm:$0xf]
  %v71 = vld [vmem:[%s3 + $0x4] sm:$0xf]
  %v72 = vld [vmem:[%s3 + $0x8] sm:$0xf]
  %v73 = vld [vmem:[%s3 + $0xc] sm:$0xf]
  %v74 = vld [vmem:[%s4] sm:$0x1]
  %v76 = vlaneseq
  %v77 = vshrl.u32 %v76, 7
  %v78 = vsub.s32 0, %v77
  %v79 = vrot.slane %v74, %v78
  %v85 = vunpack.c.l.b16 %v70
  %v86 = vunpack.c.l.b16 %v71
  %v87 = vunpack.c.l.b16 %v72
  %v88 = vunpack.c.l.b16 %v73
  %v89 = vpack.c.b16 %v86, %v85
  %v90 = vpack.c.b16 %v88, %v87
  %v94 = vsel %vm23, %v69, 0
  %96 = vmatprep.subr.bf16.mxu0 0
  %97 = vmatpush1.bf16.msra.mxu0 %v89
  %98 = vmatprep.subr.bf16.mxu0 0
  %99 = vmatpush1.bf16.msra.mxu0 %v90
  %100 = vmatprep.subr.bf16.mxu0 0
  %101 = vmatpush1.bf16.msra.mxu0 0
  %102 = vmatprep.subr.bf16.mxu0 0
  %103 = vmatpush1.bf16.msra.mxu0 0
  %104 = vmatprep.subr.bf16.mxu0 0
  %105 = vmatpush1.bf16.msra.mxu0 0
  %106 = vmatprep.subr.bf16.mxu0 0
  %107 = vmatpush1.bf16.msra.mxu0 0
  %108 = vmatprep.subr.bf16.mxu0 0
  %109 = vmatpush1.bf16.msra.mxu0 0
  %110 = vmatprep.subr.bf16.mxu0 0
  %111 = vmatpush1.bf16.msra.mxu0 0
  %112 = vmatprep.subr.bf16.mxu0 0
  %113 = vmatpush1.bf16.msra.mxu0 0
  %114 = vmatprep.subr.bf16.mxu0 0
  %115 = vmatpush1.bf16.msra.mxu0 0
  %116 = vmatprep.subr.bf16.mxu0 0
  %117 = vmatpush1.bf16.msra.mxu0 0
  %118 = vmatprep.subr.bf16.mxu0 0
  %119 = vmatpush1.bf16.msra.mxu0 0
  %120 = vmatprep.subr.bf16.mxu0 0
  %121 = vmatpush1.bf16.msra.mxu0 0
  %122 = vmatprep.subr.bf16.mxu0 0
  %123 = vmatpush1.bf16.msra.mxu0 0
  %124 = vmatprep.subr.bf16.mxu0 0
  %125 = vmatpush1.bf16.msra.mxu0 0
  %126 = vmatprep.subr.bf16.mxu0 0
  %127 = vmatpush1.bf16.msra.mxu0 0
  %128 = vmatprep.mubr.bf16.mxu0 0
  %129 = vmatmul.mubr.bf16.gmra.mrb[0].mxu0 %v94
  %v130 = vpop.f32.mrb[0].mxu0
  %v131 = vadd.f32 %v79, %v130
  %v132 = vpop.f32.mrb[0].mxu0
  %v133 = vpop.f32.mrb[0].mxu0
  %v134 = vadd.f32 %v79, %v133
  %v135 = vpop.f32.mrb[0].mxu0
  %136 = vdwg.mxu0
  %v137 = vmax.f32 %v131, 0.0
  %v138 = vmax.f32 %v134, 0.0
  %vm139 = vcmask 523264
  %140 = vst.msk [vmem:[%s5] sm:$0xff] %vm139, %v137
  %141 = vst.msk [vmem:[%s5 + $0x8] sm:$0xff] %vm139, %v138
  // Predicated region
  $region22: #{transformer_encoder_forward.16} parent=0 // pred_check
    _
  $region23: #{transformer_encoder_forward.16} parent=0 // pred_check_branch
    %143 = sbr.rel (0) target = $region25
  $region24: #{transformer_encoder_forward.16} parent=0 // pred_region
    _
  $region25: #{transformer_encoder_forward.16} parent=0 // pred_fallthru
    _
  // Predicated region
  $region26: #{transformer_encoder_forward.16} parent=0 // pred_check
    _
  $region27: #{transformer_encoder_forward.16} parent=0 // pred_check_branch
    %145 = sbr.rel (0) target = $region29
  $region28: #{transformer_encoder_forward.16} parent=0 // pred_region
    _
  $region29: #{transformer_encoder_forward.16} parent=0 // pred_fallthru
    _

// kernel: transformer_encoder_forward.23
$region0: #{transformer_encoder_forward.23}
  #allocation0 [shape = 'u32[]', space=smem, size = 0x4, offset = 0x4, fixed_abs, tag = 'smem constant byte address 0x4 - core index']
  #allocation1 [shape = 'u32[144,128]{1,0:T(1,128)}', space=vmem, size = 0x12000, scoped, tag = 'internal scratch']
  %s0 = inlined_call_operand.vmem [shape: f32[16,32], index: 0, kind: input, shape index: {}]
  %s1 = inlined_call_operand.vmem [shape: f32[1,32], index: 1, kind: input, shape index: {}]
  %s2 = inlined_call_operand.vmem [shape: f32[1,32], index: 2, kind: input, shape index: {}]
  %s3 = inlined_call_operand.hbm [shape: f32[16,32], index: 3, kind: output, shape index: {}]
  %s4 = sld [smem:[#allocation0]]
  $region22: #{transformer_encoder_forward.23} parent=0
    _
  %s6 = ssub.s32 1, %s4
  %s7 = scalar_select 0, %s6, %s4
  $region1: #{transformer_encoder_forward.23} parent=0
    #allocation2 [shape = 'u8[8192]{0}', space=vmem, size = 0x2000, scoped, tag = 'output window, operand 0, single buffered']
    #allocation3 [shape = 's32[1]{0}', space=sflag, size = 0x4, scoped, tag = 'scoped memory for transformer_encoder_forward.23']
    %8 = vsyncpa [#allocation3], 0
    // Predicated region
    $region2: #{transformer_encoder_forward.23} parent=1 // pred_check
      _
    $region3: #{transformer_encoder_forward.23} parent=1 // pred_check_branch
      %10 = sbr.rel (0) target = $region5
    $region4: #{transformer_encoder_forward.23} parent=1 // pred_region
      _
    $region5: #{transformer_encoder_forward.23} parent=1 // pred_fallthru
      _
    // Predicated region
    $region6: #{transformer_encoder_forward.23} parent=1 // pred_check
      _
    $region7: #{transformer_encoder_forward.23} parent=1 // pred_check_branch
      %12 = sbr.rel (0) target = $region9
    $region8: #{transformer_encoder_forward.23} parent=1 // pred_region
      _
    $region9: #{transformer_encoder_forward.23} parent=1 // pred_fallthru
      _
    // Predicated region
    $region10: #{transformer_encoder_forward.23} parent=1 // pred_check
      _
    $region11: #{transformer_encoder_forward.23} parent=1 // pred_check_branch
      %14 = sbr.rel (0) target = $region13
    $region12: #{transformer_encoder_forward.23} parent=1 // pred_region
      _
    $region13: #{transformer_encoder_forward.23} parent=1 // pred_fallthru
      _
    %v15 = vld [vmem:[%s0] sm:$0xff]
    %v16 = vld [vmem:[%s0 + $0x8] sm:$0xff]
    %vm17 = vcmask 261120
    %v18 = vsel %vm17, %v15, 0.0
    %19 = vadd.xlane.f32.xlu0 %v18
    %v20 = vpop.xlane.xlu0 %19
    %v21 = vsel %vm17, %v16, 0.0
    %22 = vadd.xlane.f32.xlu0 %v21
    %v23 = vpop.xlane.xlu0 %22
    %v24 = vrcp.pop 32.0
    %v25 = vmul.f32 %v20, %v24
    %v26 = vmul.f32 %v23, %v24
    %v27 = vsub.f32 %v15, %v25
    %v28 = vsub.f32 %v16, %v26
    %v29 = vmul.f32 %v27, %v27
    %v30 = vmul.f32 %v28, %v28
    %v31 = vsel %vm17, %v29, 0.0
    %32 = vadd.xlane.f32.xlu0 %v31
    %v33 = vpop.xlane.xlu0 %32
    %v34 = vsel %vm17, %v30, 0.0
    %35 = vadd.xlane.f32.xlu0 %v34
    %v36 = vpop.xlane.xlu0 %35
    %v37 = vmul.f32 %v33, %v24
    %v38 = vmul.f32 %v36, %v24
    %v39 = vadd.f32 %v37, 1e-12
    %v40 = vadd.f32 %v38, 1e-12
    %v41 = vrsqrt.pop %v39
    %v42 = vrsqrt.pop %v40
    %v43 = vmul.f32 %v27, %v41
    %v44 = vmul.f32 %v28, %v42
    %v45 = vld [vmem:[%s1] sm:$0x1]
    %v47 = vlaneseq
    %v48 = vshrl.u32 %v47, 7
    %v49 = vsub.s32 0, %v48
    %v50 = vrot.slane %v45, %v49
    %v52 = vmul.f32 %v43, %v50
    %v53 = vmul.f32 %v44, %v50
    %v54 = vld [vmem:[%s2] sm:$0x1]
    %v56 = vlaneseq
    %v57 = vshrl.u32 %v56, 7
    %v58 = vsub.s32 0, %v57
    %v59 = vrot.slane %v54, %v58
    %v61 = vadd.f32 %v52, %v59
    %v62 = vadd.f32 %v53, %v59
    %63 = vst.msk [vmem:[#allocation2] sm:$0xff] %vm17, %v61
    %64 = vst.msk [vmem:[#allocation2 + $0x8] sm:$0xff] %vm17, %v62
    // Predicated region
    $region14: #{transformer_encoder_forward.23} parent=1 // pred_check
      _
    $region15: #{transformer_encoder_forward.23} parent=1 // pred_check_branch
      %66 = sbr.rel (0) target = $region17
    $region16: #{transformer_encoder_forward.23} parent=1 // pred_region
      %s68 = ssub.s32 256, 256
      %69 = vsyncadd [#allocation3], %s68
      %s70 = sshll.u32 [#allocation2], 4
      %s71 = int_to_ptr.vmem [resolvable:$true] %s70
      %76 = dma.vmem_to_hbm [thread:$0]  %s71, 256, %s3, [#allocation3], 128, 128, 8
    $region17: #{transformer_encoder_forward.23} parent=1 // pred_fallthru
      _
    // Predicated region
    $region18: #{transformer_encoder_forward.23} parent=1 // pred_check
      _
    $region19: #{transformer_encoder_forward.23} parent=1 // pred_check_branch
      %78 = sbr.rel (0) target = $region21
    $region20: #{transformer_encoder_forward.23} parent=1 // pred_region
      %79 = dma.done [#allocation3], 256
    $region21: #{transformer_encoder_forward.23} parent=1 // pred_fallthru
      _
    %80 = vsyncpa [#allocation3], 1

// kernel: transformer_encoder_forward.17
$region0: #{transformer_encoder_forward.17}
  #allocation0 [shape = 'u32[]', space=smem, size = 0x4, offset = 0x4, fixed_abs, tag = 'smem constant byte address 0x4 - core index']
  #allocation1 [shape = 'u32[144,128]{1,0:T(1,128)}', space=vmem, size = 0x12000, scoped, tag = 'internal scratch']
  %s0 = inlined_call_operand.vmem [shape: f32[16,64], index: 0, kind: input, shape index: {}]
  %s1 = inlined_call_operand.vmem [shape: bf16[64,32], index: 1, kind: input, shape index: {}]
  %s2 = inlined_call_operand.vmem [shape: f32[1,32], index: 2, kind: input, shape index: {}]
  %s3 = inlined_call_operand.vmem [shape: f32[16,32], index: 3, kind: input, shape index: {}]
  %s4 = inlined_call_operand.vmem [shape: f32[16,32], index: 4, kind: output, shape index: {}]
  %s5 = sld [smem:[#allocation0]]
  $region26: #{transformer_encoder_forward.17} parent=0
    _
  %s7 = ssub.s32 1, %s5
  %s8 = scalar_select 0, %s7, %s5
  // Predicated region
  $region2: #{transformer_encoder_forward.17} parent=0 // pred_check
    _
  $region3: #{transformer_encoder_forward.17} parent=0 // pred_check_branch
    %10 = sbr.rel (0) target = $region5
  $region4: #{transformer_encoder_forward.17} parent=0 // pred_region
    _
  $region5: #{transformer_encoder_forward.17} parent=0 // pred_fallthru
    _
  // Predicated region
  $region6: #{transformer_encoder_forward.17} parent=0 // pred_check
    _
  $region7: #{transformer_encoder_forward.17} parent=0 // pred_check_branch
    %12 = sbr.rel (0) target = $region9
  $region8: #{transformer_encoder_forward.17} parent=0 // pred_region
    _
  $region9: #{transformer_encoder_forward.17} parent=0 // pred_fallthru
    _
  // Predicated region
  $region10: #{transformer_encoder_forward.17} parent=0 // pred_check
    _
  $region11: #{transformer_encoder_forward.17} parent=0 // pred_check_branch
    %14 = sbr.rel (0) target = $region13
  $region12: #{transformer_encoder_forward.17} parent=0 // pred_region
    _
  $region13: #{transformer_encoder_forward.17} parent=0 // pred_fallthru
    _
  // Predicated region
  $region14: #{transformer_encoder_forward.17} parent=0 // pred_check
    _
  $region15: #{transformer_encoder_forward.17} parent=0 // pred_check_branch
    %16 = sbr.rel (0) target = $region17
  $region16: #{transformer_encoder_forward.17} parent=0 // pred_region
    _
  $region17: #{transformer_encoder_forward.17} parent=0 // pred_fallthru
    _
  %v18 = vld [vmem:[%s0] sm:$0xff]
  %v19 = vld [vmem:[%s0 + $0x8] sm:$0xff]
  %v20 = vpack.c.bf16 %v19, %v18
  %v21 = vld [vmem:[%s1] sm:$0xf]
  %v22 = vld [vmem:[%s1 + $0x4] sm:$0xf]
  %v23 = vld [vmem:[%s1 + $0x8] sm:$0xf]
  %v24 = vld [vmem:[%s1 + $0xc] sm:$0xf]
  %v25 = vld [vmem:[%s1 + $0x10] sm:$0xf]
  %v26 = vld [vmem:[%s1 + $0x14] sm:$0xf]
  %v27 = vld [vmem:[%s1 + $0x18] sm:$0xf]
  %v28 = vld [vmem:[%s1 + $0x1c] sm:$0xf]
  %v29 = vld [vmem:[%s2] sm:$0x1]
  %v31 = vlaneseq
  %v32 = vshrl.u32 %v31, 7
  %v33 = vsub.s32 0, %v32
  %v34 = vrot.slane %v29, %v33
  %v44 = vunpack.c.l.b16 %v21
  %v45 = vunpack.c.l.b16 %v22
  %v46 = vunpack.c.l.b16 %v23
  %v47 = vunpack.c.l.b16 %v24
  %v48 = vunpack.c.l.b16 %v25
  %v49 = vunpack.c.l.b16 %v26
  %v50 = vunpack.c.l.b16 %v27
  %v51 = vunpack.c.l.b16 %v28
  %v52 = vpack.c.b16 %v45, %v44
  %v53 = vpack.c.b16 %v47, %v46
  %v54 = vpack.c.b16 %v49, %v48
  %v55 = vpack.c.b16 %v51, %v50
  %vm60 = vcmask 523264
  %v62 = vsel %vm60, %v20, 0
  %64 = vmatprep.subr.bf16.mxu0 0
  %65 = vmatpush1.bf16.msra.mxu0 %v52
  %66 = vmatprep.subr.bf16.mxu0 0
  %67 = vmatpush1.bf16.msra.mxu0 %v53
  %68 = vmatprep.subr.bf16.mxu0 0
  %69 = vmatpush1.bf16.msra.mxu0 %v54
  %70 = vmatprep.subr.bf16.mxu0 0
  %71 = vmatpush1.bf16.msra.mxu0 %v55
  %72 = vmatprep.subr.bf16.mxu0 0
  %73 = vmatpush1.bf16.msra.mxu0 0
  %74 = vmatprep.subr.bf16.mxu0 0
  %75 = vmatpush1.bf16.msra.mxu0 0
  %76 = vmatprep.subr.bf16.mxu0 0
  %77 = vmatpush1.bf16.msra.mxu0 0
  %78 = vmatprep.subr.bf16.mxu0 0
  %79 = vmatpush1.bf16.msra.mxu0 0
  %80 = vmatprep.subr.bf16.mxu0 0
  %81 = vmatpush1.bf16.msra.mxu0 0
  %82 = vmatprep.subr.bf16.mxu0 0
  %83 = vmatpush1.bf16.msra.mxu0 0
  %84 = vmatprep.subr.bf16.mxu0 0
  %85 = vmatpush1.bf16.msra.mxu0 0
  %86 = vmatprep.subr.bf16.mxu0 0
  %87 = vmatpush1.bf16.msra.mxu0 0
  %88 = vmatprep.subr.bf16.mxu0 0
  %89 = vmatpush1.bf16.msra.mxu0 0
  %90 = vmatprep.subr.bf16.mxu0 0
  %91 = vmatpush1.bf16.msra.mxu0 0
  %92 = vmatprep.subr.bf16.mxu0 0
  %93 = vmatpush1.bf16.msra.mxu0 0
  %94 = vmatprep.subr.bf16.mxu0 0
  %95 = vmatpush1.bf16.msra.mxu0 0
  %96 = vmatprep.mubr.bf16.mxu0 0
  %97 = vmatmul.mubr.bf16.gmra.mrb[0].mxu0 %v62
  %v98 = vpop.f32.mrb[0].mxu0
  %v99 = vadd.f32 %v34, %v98
  %v100 = vpop.f32.mrb[0].mxu0
  %v101 = vpop.f32.mrb[0].mxu0
  %v102 = vadd.f32 %v34, %v101
  %v103 = vpop.f32.mrb[0].mxu0
  %104 = vdwg.mxu0
  %v105 = vld [vmem:[%s3] sm:$0xff]
  %v106 = vld [vmem:[%s3 + $0x8] sm:$0xff]
  %v107 = vadd.f32 %v105, %v99
  %v108 = vadd.f32 %v106, %v102
  %vm109 = vcmask 261120
  %110 = vst.msk [vmem:[%s4] sm:$0xff] %vm109, %v107
  %111 = vst.msk [vmem:[%s4 + $0x8] sm:$0xff] %vm109, %v108
  // Predicated region
  $region18: #{transformer_encoder_forward.17} parent=0 // pred_check
    _
  $region19: #{transformer_encoder_forward.17} parent=0 // pred_check_branch
    %113 = sbr.rel (0) target = $region21
  $region20: #{transformer_encoder_forward.17} parent=0 // pred_region
    _
  $region21: #{transformer_encoder_forward.17} parent=0 // pred_fallthru
    _
  // Predicated region
  $region22: #{transformer_encoder_forward.17} parent=0 // pred_check
    _
  $region23: #{transformer_encoder_forward.17} parent=0 // pred_check_branch
    %115 = sbr.rel (0) target = $region25
  $region24: #{transformer_encoder_forward.17} parent=0 // pred_region
    _
  $region25: #{transformer_encoder_forward.17} parent=0 // pred_fallthru
    _

</llo_original>
